<compile_context>
chip_gen: v7x
topology: tpu7x:2x2x1
jax: 0.10.0
libtpu: 0.0.40
codegen_flags: <defaults>
</compile_context>

<pallas_src>
import functools

import jax
import jax.numpy as jnp
from jax import lax
from jax.experimental import pallas as pl
from jax.experimental.pallas import tpu as pltpu


# ----------------------------------------------------------------------------
# helpers
# ----------------------------------------------------------------------------
def _round_up(n, m):
    return ((n + m - 1) // m) * m


def _pad2(x, rows, cols):
    r, c = x.shape
    if r == rows and c == cols:
        return x
    return jnp.pad(x, ((0, rows - r), (0, cols - c)))


def _pick_tile(n, target, unit=128):
    """Largest multiple of `unit` <= target that evenly divides round_up(n, unit).

    Guarantees: padding never exceeds unit-rounding (no all-zero padding
    tiles), tile >= unit, padded extent is an exact multiple of the tile.
    """
    n_pad = _round_up(max(n, unit), unit)
    t = min((target // unit) * unit, n_pad)
    t = max(t, unit)
    while t > unit and n_pad % t != 0:
        t -= unit
    return t, n_pad


@functools.lru_cache(maxsize=1)
def _num_tensorcores():
    """Best-effort TensorCores-per-chip (megacore) count."""
    try:
        kind = jax.devices()[0].device_kind.lower()
    except Exception:  # pragma: no cover - defensive
        return 1
    # v4 and v7x expose 2 TensorCores per chip; v5e/v6e have 1.
    if "v4" in kind or "7x" in kind or " v7" in kind:
        return 2
    return 1


# ----------------------------------------------------------------------------
# Kernel 1: fused doc encode   doc = relu((X@E) @ W_fine^T + b_fine) + (X@E)
# grid = (B tiles[parallel], V tiles[reduction])
# ----------------------------------------------------------------------------
def _doc_encode_kernel(x_ref, e_ref, w_ref, b_ref, o_ref, acc_ref):
    k = pl.program_id(1)

    @pl.when(k == 0)
    def _():
        acc_ref[...] = jnp.zeros_like(acc_ref)

    acc_ref[...] += jnp.dot(x_ref[...], e_ref[...],
                            preferred_element_type=jnp.float32)

    @pl.when(k == pl.num_programs(1) - 1)
    def _():
        emb = acc_ref[...]                                  # f32 [tm, Dp]
        # emb @ W^T without transposing W (contract last dims on the MXU).
        h = lax.dot_general(emb.astype(jnp.bfloat16), w_ref[...],
                            dimension_numbers=(((1,), (1,)), ((), ())),
                            preferred_element_type=jnp.float32)
        o_ref[...] = (jnp.maximum(h + b_ref[...], 0.0) + emb).astype(o_ref.dtype)


def _encode_docs_padded(X, prep, tm, Bp):
    """X: [B, V] raw features -> padded f32 doc representation [Bp, Dp]."""
    B, V = X.shape
    assert V == prep["V"], (V, prep["V"])
    Vp, Dp, tk = prep["Vp"], prep["Dp"], prep["tk_doc"]

    Xp = _pad2(X.astype(jnp.bfloat16), Bp, Vp)              # only per-call prep

    return pl.pallas_call(
        _doc_encode_kernel,
        out_shape=jax.ShapeDtypeStruct((Bp, Dp), jnp.float32),
        grid_spec=pltpu.PrefetchScalarGridSpec(
            num_scalar_prefetch=0,
            grid=(Bp // tm, Vp // tk),
            in_specs=[
                pl.BlockSpec((tm, tk), lambda i, k: (i, k)),
                pl.BlockSpec((tk, Dp), lambda i, k: (k, 0)),
                pl.BlockSpec((Dp, Dp), lambda i, k: (0, 0)),
                pl.BlockSpec((1, Dp), lambda i, k: (0, 0)),
            ],
            out_specs=pl.BlockSpec((tm, Dp), lambda i, k: (i, 0)),
            scratch_shapes=[pltpu.VMEM((tm, Dp), jnp.float32)],
        ),
        compiler_params=pltpu.CompilerParams(
            dimension_semantics=("parallel", "arbitrary")),
    )(Xp, prep["E"], prep["w_fine"], prep["b_fine"])


# ----------------------------------------------------------------------------
# Kernel 2: fused label path (input-independent, computed once at setup)
#   emb = lbl_wrds @ E
#   fts = relu(emb @ W_lbl^T + b_lbl) + emb
#   W_c = alpha * l2norm(fts) + beta * l2norm(U)
# grid = (L tiles[parallel], V tiles[reduction])
# ----------------------------------------------------------------------------
def _label_path_kernel(ab_ref, lw_ref, e_ref, w_ref, b_ref, u_ref,
                       wc_ref, acc_ref):
    k = pl.program_id(1)

    @pl.when(k == 0)
    def _():
        acc_ref[...] = jnp.zeros_like(acc_ref)

    acc_ref[...] += jnp.dot(lw_ref[...], e_ref[...],
                            preferred_element_type=jnp.float32)

    @pl.when(k == pl.num_programs(1) - 1)
    def _():
        emb = acc_ref[...]                                  # f32 [tl, Dp]
        h = lax.dot_general(emb.astype(jnp.bfloat16), w_ref[...],
                            dimension_numbers=(((1,), (1,)), ((), ())),
                            preferred_element_type=jnp.float32)
        fts = jnp.maximum(h + b_ref[...], 0.0) + emb        # label_fts, f32
        fn = fts / jnp.maximum(
            jnp.sqrt(jnp.sum(fts * fts, axis=-1, keepdims=True)), 1e-12)
        u = u_ref[...]
        un = u / jnp.maximum(
            jnp.sqrt(jnp.sum(u * u, axis=-1, keepdims=True)), 1e-12)
        wc_ref[...] = (ab_ref[0] * fn + ab_ref[1] * un).astype(wc_ref.dtype)


def build_classifier_weights(lbl_wrds, E, w_label, b_label, u_clf, alpha, beta,
                             *, tl_target=512, tk_target=1024):
    L, V = lbl_wrds.shape
    V2, D = E.shape
    assert V == V2
    Dp = _round_up(D, 128)
    tk, Vp = _pick_tile(V, tk_target, 128)
    tl, Lp = _pick_tile(L, tl_target, 128)
    # Only split the label rows across cores on chips that actually have 2 TCs.
    if _num_tensorcores() >= 2 and Lp == tl and tl % 256 == 0:
        tl //= 2

    LWp = _pad2(lbl_wrds.astype(jnp.bfloat16), Lp, Vp)
    Ep = _pad2(E.astype(jnp.bfloat16), Vp, Dp)
    Wp = _pad2(w_label.astype(jnp.bfloat16), Dp, Dp)
    bp = jnp.pad(b_label.astype(jnp.float32), (0, Dp - D)).reshape(1, Dp)
    Up = _pad2(u_clf.astype(jnp.float32), Lp, Dp)
    ab = jnp.array([alpha, beta], jnp.float32)

    out = pl.pallas_call(
        _label_path_kernel,
        out_shape=jax.ShapeDtypeStruct((Lp, Dp), jnp.bfloat16),
        grid_spec=pltpu.PrefetchScalarGridSpec(
            num_scalar_prefetch=0,
            grid=(Lp // tl, Vp // tk),
            in_specs=[
                pl.BlockSpec(memory_space=pltpu.MemorySpace.SMEM),
                pl.BlockSpec((tl, tk), lambda i, k: (i, k)),
                pl.BlockSpec((tk, Dp), lambda i, k: (k, 0)),
                pl.BlockSpec((Dp, Dp), lambda i, k: (0, 0)),
                pl.BlockSpec((1, Dp), lambda i, k: (0, 0)),
                pl.BlockSpec((tl, Dp), lambda i, k: (i, 0)),
            ],
            out_specs=pl.BlockSpec((tl, Dp), lambda i, k: (i, 0)),
            scratch_shapes=[pltpu.VMEM((tl, Dp), jnp.float32)],
        ),
        compiler_params=pltpu.CompilerParams(
            dimension_semantics=("parallel", "arbitrary")),
    )(ab, LWp, Ep, Wp, bp, Up)
    return out[:L, :D]


# ----------------------------------------------------------------------------
# Kernel 3: logits = doc @ W_c^T + bias   (no transpose of W_c anywhere)
# grid = (B tiles, L tiles) — both parallel
# ----------------------------------------------------------------------------
def _logits_kernel(doc_ref, wc_ref, bias_ref, o_ref):
    acc = lax.dot_general(doc_ref[...].astype(jnp.bfloat16), wc_ref[...],
                          dimension_numbers=(((1,), (1,)), ((), ())),
                          preferred_element_type=jnp.float32)
    o_ref[...] = (acc + bias_ref[...]).astype(o_ref.dtype)


def _compute_logits_padded(doc_p, prep, tm, Bp):
    Dp, Lp, tn = prep["Dp"], prep["Lp"], prep["tn_logits"]
    return pl.pallas_call(
        _logits_kernel,
        out_shape=jax.ShapeDtypeStruct((Bp, Lp), jnp.float32),
        grid_spec=pltpu.PrefetchScalarGridSpec(
            num_scalar_prefetch=0,
            grid=(Bp // tm, Lp // tn),
            in_specs=[
                pl.BlockSpec((tm, Dp), lambda i, j: (i, 0)),
                pl.BlockSpec((tn, Dp), lambda i, j: (j, 0)),
                pl.BlockSpec((1, tn), lambda i, j: (0, j)),
            ],
            out_specs=pl.BlockSpec((tm, tn), lambda i, j: (i, j)),
        ),
        compiler_params=pltpu.CompilerParams(
            dimension_semantics=("parallel", "parallel")),
    )(doc_p, prep["Wc"], prep["bias"])


# ----------------------------------------------------------------------------
# DECAFh API: label branch + all batch-invariant padding/casting hoisted to
# setup (== _pred_init / _eval); per-batch cost is doc encode + logits only.
# ----------------------------------------------------------------------------
def decaf_h_setup(params, lbl_wrds, *, tk_doc_target=2048, tn_logits_target=2048):
    """One-time: build W_c and pre-pad / pre-cast every batch-invariant operand."""
    E = params["embed_weight"]
    V, D = E.shape
    L = params["u_clf"].shape[0]
    Dp = _round_up(D, 128)

    # Label branch (input-independent) -> classifier weights W_c, once.
    Wc = build_classifier_weights(
        lbl_wrds, E, params["w_label"], params["b_label"],
        params["u_clf"], params["alpha"], params["beta"])

    # Tiling for the per-batch kernels (chosen once, no padding-only tiles).
    tk_doc, Vp = _pick_tile(V, tk_doc_target, 128)
    tn_logits, Lp = _pick_tile(L, tn_logits_target, 128)
    if _num_tensorcores() >= 2 and Lp == tn_logits and tn_logits % 256 == 0:
        tn_logits //= 2     # give both TensorCores a label block (v4/v7x only)

    return {
        "V": V, "D": D, "L": L,
        "Dp": Dp, "Vp": Vp, "Lp": Lp,
        "tk_doc": tk_doc, "tn_logits": tn_logits,
        # Pre-padded / pre-cast once (the big tensors at real DECAF scale):
        "E": _pad2(E.astype(jnp.bfloat16), Vp, Dp),
        "w_fine": _pad2(params["w_fine"].astype(jnp.bfloat16), Dp, Dp),
        "b_fine": jnp.pad(params["b_fine"].astype(jnp.float32),
                          (0, Dp - D)).reshape(1, Dp),
        "Wc": _pad2(Wc.astype(jnp.bfloat16), Lp, Dp),
        "bias": jnp.pad(params["bias_clf"].astype(jnp.float32),
                        (0, Lp - L)).reshape(1, Lp),
    }


def decaf_h_forward(prep, X):
    """Per-batch forward: logits [B, num_labels]."""
    B = X.shape[0]
    tm, Bp = _pick_tile(B, 512, unit=16)          # bf16 sublane quantum = 16
    doc_p = _encode_docs_padded(X, prep, tm, Bp)          # [Bp, Dp] f32
    logits_p = _compute_logits_padded(doc_p, prep, tm, Bp)  # [Bp, Lp] f32
    return logits_p[:B, :prep["L"]]


def decaf_h_reference(params, X, lbl_wrds):
    """Pure-JAX f32 reference for correctness check."""
    E = params["embed_weight"]
    doc_coarse = X @ E
    doc = jnp.maximum(doc_coarse @ params["w_fine"].T + params["b_fine"], 0.0) \
        + doc_coarse
    lbl_emb = lbl_wrds @ E
    label_fts = jnp.maximum(lbl_emb @ params["w_label"].T + params["b_label"],
                            0.0) + lbl_emb

    def l2n(m):
        return m / jnp.maximum(jnp.linalg.norm(m, axis=-1, keepdims=True), 1e-12)

    Wc = params["alpha"] * l2n(label_fts) + params["beta"] * l2n(params["u_clf"])
    return doc @ Wc.T + params["bias_clf"]


# ----------------------------------------------------------------------------
if __name__ == "__main__":
    B, V, D, L = 8, 256, 128, 256   # batch, vocabulary+1, embedding_dims, num_labels

    key = jax.random.PRNGKey(0)
    keys = jax.random.split(key, 10)

    params = {
        "embed_weight": 0.05 * jax.random.normal(keys[0], (V, D), jnp.float32),
        "w_fine": 0.05 * jax.random.normal(keys[1], (D, D), jnp.float32),
        "b_fine": 0.01 * jax.random.normal(keys[2], (D,), jnp.float32),
        "w_label": 0.05 * jax.random.normal(keys[3], (D, D), jnp.float32),
        "b_label": 0.01 * jax.random.normal(keys[4], (D,), jnp.float32),
        "u_clf": 0.05 * jax.random.normal(keys[5], (L, D), jnp.float32),
        "bias_clf": 0.01 * jax.random.normal(keys[6], (L,), jnp.float32),
        "alpha": 0.5,
        "beta": 0.5,
    }

    # Dense view of sparse tf-idf doc features and of the (row-L2-normalized,
    # as in _load_fts) label-word matrix.
    xm = jax.random.uniform(keys[7], (B, V)) < 0.1
    X = jnp.where(xm, jax.random.uniform(keys[7], (B, V)), 0.0).astype(jnp.float32)
    lm = jax.random.uniform(keys[8], (L, V)) < 0.05
    LW = jnp.where(lm, jax.random.uniform(keys[9], (L, V)), 0.0).astype(jnp.float32)
    LW = LW / jnp.maximum(jnp.linalg.norm(LW, axis=-1, keepdims=True), 1e-12)

    prep = decaf_h_setup(params, LW)                               # once per model
    jax.block_until_ready(prep["Wc"])
    logits = jax.block_until_ready(decaf_h_forward(prep, X))       # per batch
    ref = jax.block_until_ready(decaf_h_reference(params, X, LW))

    assert logits.shape == (B, L), logits.shape
    # bf16 MXU operands vs f32 reference -> bf16-appropriate tolerance.
    assert jnp.allclose(logits, ref, rtol=2e-2, atol=5e-3), (
        float(jnp.max(jnp.abs(logits - ref))))

    print("KERNEL_OK")
</pallas_src>

<mosaic_0001>
module attributes {stable_mosaic.version = 11 : i64} {
  func.func @_label_path_kernel(%arg0: i32, %arg1: i32, %arg2: memref<2xf32, #tpu.memory_space<smem>>, %arg3: memref<256x256xbf16, #tpu.memory_space<vmem>>, %arg4: memref<256x128xbf16, #tpu.memory_space<vmem>>, %arg5: memref<128x128xbf16, #tpu.memory_space<vmem>>, %arg6: memref<1x128xf32, #tpu.memory_space<vmem>>, %arg7: memref<256x128xf32, #tpu.memory_space<vmem>>, %arg8: memref<256x128xbf16, #tpu.memory_space<vmem>>, %arg9: memref<256x128xf32, #tpu.memory_space<vmem>>) attributes {dimension_semantics = [#tpu.dimension_semantics<parallel>, #tpu.dimension_semantics<arbitrary>], iteration_bounds = array<i64: 1, 1>, scalar_prefetch = 0 : i64, scratch_operands = 1 : i64, tpu.core_type = #tpu.core_type<tc>, window_params = [{transform_indices = @transform_0, window_bounds = array<i64: 2>}, {transform_indices = @transform_1, window_bounds = array<i64: 256, 256>}, {transform_indices = @transform_2, window_bounds = array<i64: 256, 128>}, {pipeline_mode = #tpu.pipeline_mode<synchronous>, transform_indices = @transform_3, window_bounds = array<i64: 128, 128>}, {pipeline_mode = #tpu.pipeline_mode<synchronous>, transform_indices = @transform_4, window_bounds = array<i64: 1, 128>}, {transform_indices = @transform_5, window_bounds = array<i64: 256, 128>}, {transform_indices = @transform_6, window_bounds = array<i64: 256, 128>}]} {
    %c0_i32 = arith.constant 0 : i32
    %0 = arith.cmpi eq, %arg1, %c0_i32 : i32
    %1 = arith.extui %0 : i1 to i32
    %c0_i32_0 = arith.constant 0 : i32
    %2 = arith.cmpi ne, %1, %c0_i32_0 : i32
    scf.if %2 {
      %cst_10 = arith.constant 0.000000e+00 : f32
      %12 = vector.broadcast %cst_10 : f32 to vector<256x128xf32>
      %c0_11 = arith.constant 0 : index
      %c0_12 = arith.constant 0 : index
      %13 = vector.load %arg9[%c0_11, %c0_12] : memref<256x128xf32, #tpu.memory_space<vmem>>, vector<256x128xf32>
      tpu.vector_store %arg9[%c0_11, %c0_12], %12 {strides = array<i32>} : memref<256x128xf32, #tpu.memory_space<vmem>>, vector<256x128xf32>,
    } else {
    }
    %c0 = arith.constant 0 : index
    %c0_1 = arith.constant 0 : index
    %3 = vector.load %arg9[%c0, %c0_1] : memref<256x128xf32, #tpu.memory_space<vmem>>, vector<256x128xf32>
    %c0_2 = arith.constant 0 : index
    %c0_3 = arith.constant 0 : index
    %4 = vector.load %arg3[%c0_2, %c0_3] : memref<256x256xbf16, #tpu.memory_space<vmem>>, vector<256x256xbf16>
    %c0_4 = arith.constant 0 : index
    %c0_5 = arith.constant 0 : index
    %5 = vector.load %arg4[%c0_4, %c0_5] : memref<256x128xbf16, #tpu.memory_space<vmem>>, vector<256x128xbf16>
    %cst = arith.constant dense<0.000000e+00> : vector<256x128xf32>
    %6 = tpu.matmul %4, %5, %cst {dimension_numbers = #tpu.dot_dimension_numbers<[1], [0], [0], [1], [0, 0, 1, 1], [], []>} : vector<256x256xbf16>, vector<256x128xbf16>, vector<256x128xf32> -> vector<256x128xf32>
    %7 = arith.addf %3, %6 : vector<256x128xf32>
    %c0_6 = arith.constant 0 : index
    %c0_7 = arith.constant 0 : index
    %8 = vector.load %arg9[%c0_6, %c0_7] : memref<256x128xf32, #tpu.memory_space<vmem>>, vector<256x128xf32>
    tpu.vector_store %arg9[%c0_6, %c0_7], %7 {strides = array<i32>} : memref<256x128xf32, #tpu.memory_space<vmem>>, vector<256x128xf32>,
    %c0_i32_8 = arith.constant 0 : i32
    %9 = arith.cmpi eq, %arg1, %c0_i32_8 : i32
    %10 = arith.extui %9 : i1 to i32
    %c0_i32_9 = arith.constant 0 : i32
    %11 = arith.cmpi ne, %10, %c0_i32_9 : i32
    scf.if %11 {
      %c0_10 = arith.constant 0 : index
      %c0_11 = arith.constant 0 : index
      %12 = vector.load %arg9[%c0_10, %c0_11] : memref<256x128xf32, #tpu.memory_space<vmem>>, vector<256x128xf32>
      %13 = arith.truncf %12 : vector<256x128xf32> to vector<256x128xbf16>
      %c0_12 = arith.constant 0 : index
      %c0_13 = arith.constant 0 : index
      %14 = vector.load %arg5[%c0_12, %c0_13] : memref<128x128xbf16, #tpu.memory_space<vmem>>, vector<128x128xbf16>
      %cst_14 = arith.constant dense<0.000000e+00> : vector<256x128xf32>
      %15 = tpu.matmul %13, %14, %cst_14 {dimension_numbers = #tpu.dot_dimension_numbers<[1], [1], [0], [0], [0, 0, 1, 0], [], []>} : vector<256x128xbf16>, vector<128x128xbf16>, vector<256x128xf32> -> vector<256x128xf32>
      %c0_15 = arith.constant 0 : index
      %c0_16 = arith.constant 0 : index
      %16 = vector.load %arg6[%c0_15, %c0_16] : memref<1x128xf32, #tpu.memory_space<vmem>>, vector<1x128xf32>
      %17 = vector.broadcast %16 : vector<1x128xf32> to vector<256x128xf32>
      %18 = arith.addf %15, %17 : vector<256x128xf32>
      %cst_17 = arith.constant 0.000000e+00 : f32
      %19 = vector.broadcast %cst_17 : f32 to vector<256x128xf32>
      %20 = arith.maximumf %18, %19 : vector<256x128xf32>
      %21 = arith.addf %20, %12 : vector<256x128xf32>
      %22 = arith.mulf %21, %21 : vector<256x128xf32>
      %cst_18 = arith.constant dense<0.000000e+00> : vector<256xf32>
      %23 = vector.multi_reduction <add>, %22, %cst_18 [1] : vector<256x128xf32> to vector<256xf32>
      %24 = vector.shape_cast %23 : vector<256xf32> to vector<256x1xf32>
      %25 = math.sqrt %24 : vector<256x1xf32>
      %cst_19 = arith.constant 9.99999996E-13 : f32
      %26 = vector.broadcast %cst_19 : f32 to vector<256x1xf32>
      %27 = arith.maximumf %25, %26 : vector<256x1xf32>
      %28 = vector.broadcast %27 : vector<256x1xf32> to vector<256x128xf32>
      %29 = arith.divf %21, %28 : vector<256x128xf32>
      %c0_20 = arith.constant 0 : index
      %c0_21 = arith.constant 0 : index
      %30 = vector.load %arg7[%c0_20, %c0_21] : memref<256x128xf32, #tpu.memory_space<vmem>>, vector<256x128xf32>
      %31 = arith.mulf %30, %30 : vector<256x128xf32>
      %cst_22 = arith.constant dense<0.000000e+00> : vector<256xf32>
      %32 = vector.multi_reduction <add>, %31, %cst_22 [1] : vector<256x128xf32> to vector<256xf32>
      %33 = vector.shape_cast %32 : vector<256xf32> to vector<256x1xf32>
      %34 = math.sqrt %33 : vector<256x1xf32>
      %cst_23 = arith.constant 9.99999996E-13 : f32
      %35 = vector.broadcast %cst_23 : f32 to vector<256x1xf32>
      %36 = arith.maximumf %34, %35 : vector<256x1xf32>
      %37 = vector.broadcast %36 : vector<256x1xf32> to vector<256x128xf32>
      %38 = arith.divf %30, %37 : vector<256x128xf32>
      %c0_24 = arith.constant 0 : index
      %39 = memref.load %arg2[%c0_24] : memref<2xf32, #tpu.memory_space<smem>>
      %40 = vector.broadcast %39 : f32 to vector<256x128xf32>
      %41 = arith.mulf %40, %29 : vector<256x128xf32>
      %c1 = arith.constant 1 : index
      %42 = memref.load %arg2[%c1] : memref<2xf32, #tpu.memory_space<smem>>
      %43 = vector.broadcast %42 : f32 to vector<256x128xf32>
      %44 = arith.mulf %43, %38 : vector<256x128xf32>
      %45 = arith.addf %41, %44 : vector<256x128xf32>
      %46 = arith.truncf %45 : vector<256x128xf32> to vector<256x128xbf16>
      %c0_25 = arith.constant 0 : index
      %c0_26 = arith.constant 0 : index
      %47 = vector.load %arg8[%c0_25, %c0_26] : memref<256x128xbf16, #tpu.memory_space<vmem>>, vector<256x128xbf16>
      tpu.vector_store %arg8[%c0_25, %c0_26], %46 {strides = array<i32>} : memref<256x128xbf16, #tpu.memory_space<vmem>>, vector<256x128xbf16>,
    } else {
    }
    return
  }
  func.func @transform_0(%arg0: i32, %arg1: i32) -> i32 {
    %c0_i32 = arith.constant 0 : i32
    %c0_i32_0 = arith.constant 0 : i32
    return %c0_i32 : i32
  }
  func.func @transform_1(%arg0: i32, %arg1: i32) -> (i32, i32) {
    %c0_i32 = arith.constant 0 : i32
    return %arg0, %arg1 : i32, i32
  }
  func.func @transform_2(%arg0: i32, %arg1: i32) -> (i32, i32) {
    %c0_i32 = arith.constant 0 : i32
    %c0_i32_0 = arith.constant 0 : i32
    return %arg1, %c0_i32 : i32, i32
  }
  func.func @transform_3(%arg0: i32, %arg1: i32) -> (i32, i32) {
    %c0_i32 = arith.constant 0 : i32
    %c0_i32_0 = arith.constant 0 : i32
    %c0_i32_1 = arith.constant 0 : i32
    return %c0_i32, %c0_i32_0 : i32, i32
  }
  func.func @transform_4(%arg0: i32, %arg1: i32) -> (i32, i32) {
    %c0_i32 = arith.constant 0 : i32
    %c0_i32_0 = arith.constant 0 : i32
    %c0_i32_1 = arith.constant 0 : i32
    return %c0_i32, %c0_i32_0 : i32, i32
  }
  func.func @transform_5(%arg0: i32, %arg1: i32) -> (i32, i32) {
    %c0_i32 = arith.constant 0 : i32
    %c0_i32_0 = arith.constant 0 : i32
    return %arg0, %c0_i32 : i32, i32
  }
  func.func @transform_6(%arg0: i32, %arg1: i32) -> (i32, i32) {
    %c0_i32 = arith.constant 0 : i32
    %c0_i32_0 = arith.constant 0 : i32
    return %arg0, %c0_i32 : i32, i32
  }
}

</mosaic_0001>

<llo_original>
// kernel: tpu_custom_call.1
$region0: #{tpu_custom_call.1}
  #allocation0 [shape = 'u32[]', space=smem, size = 0x4, offset = 0x4, fixed_abs, tag = 'smem constant byte address 0x4 - core index']
  #allocation1 [shape = 'u32[144,128]{1,0:T(1,128)}', space=vmem, size = 0x12000, scoped, tag = 'internal scratch']
  #allocation2 [shape = 'f32[256,128]{1,0:T(8,128)}', space=vmem, size = 0x20000, scoped, tag = 'scratch operand']
  %s0 = inlined_call_operand.hbm [shape: f32[2], index: 0, kind: input, shape index: {}]
  %s1 = inlined_call_operand.hbm [shape: bf16[256,256], index: 1, kind: input, shape index: {}]
  %s2 = inlined_call_operand.hbm [shape: bf16[256,128], index: 2, kind: input, shape index: {}]
  %s3 = inlined_call_operand.hbm [shape: bf16[128,128], index: 3, kind: input, shape index: {}]
  %s4 = inlined_call_operand.vmem [shape: f32[1,128], index: 4, kind: input, shape index: {}]
  %s5 = inlined_call_operand.hbm [shape: f32[256,128], index: 5, kind: input, shape index: {}]
  %s6 = inlined_call_operand.hbm [shape: bf16[256,128], index: 6, kind: output, shape index: {}]
  %s7 = sld [smem:[#allocation0]]
  $region62: #{tpu_custom_call.1} parent=0
    _
  %s9 = ssub.s32 1, %s7
  %s10 = scalar_select 0, %s9, %s7
  $region1: #{tpu_custom_call.1} parent=0
    #allocation3 [shape = 'u8[512]{0}', space=smem, size = 0x200, scoped, tag = 'input window, operand 0, single buffered']
    #allocation4 [shape = 's32[1]{0}', space=sflag, size = 0x4, scoped, tag = 'scoped memory for tpu_custom_call.1']
    #allocation5 [shape = 's32[1]{0}', space=sflag, size = 0x4, scoped, tag = 'scoped memory for tpu_custom_call.1']
    #allocation6 [shape = 's32[1]{0}', space=sflag, size = 0x4, scoped, tag = 'scoped memory for tpu_custom_call.1']
    #allocation7 [shape = 'u8[131072]{0}', space=vmem, size = 0x20000, scoped, tag = 'input window, operand 1, single buffered']
    #allocation8 [shape = 'u8[65536]{0}', space=vmem, size = 0x10000, scoped, tag = 'input window, operand 2, single buffered']
    #allocation9 [shape = 's32[1]{0}', space=sflag, size = 0x4, scoped, tag = 'scoped memory for tpu_custom_call.1']
    #allocation10 [shape = 'u8[32768]{0}', space=vmem, size = 0x8000, scoped, tag = 'input window, operand 3, single buffered']
    #allocation11 [shape = 'u8[131072]{0}', space=vmem, size = 0x20000, scoped, tag = 'input window, operand 5, single buffered']
    #allocation12 [shape = 's32[1]{0}', space=sflag, size = 0x4, scoped, tag = 'scoped memory for tpu_custom_call.1']
    #allocation13 [shape = 'u8[65536]{0}', space=vmem, size = 0x10000, scoped, tag = 'output window, operand 0, single buffered']
    %11 = vsyncpa [#allocation6], 0
    %12 = vsyncpa [#allocation4], 0
    %13 = vsyncpa [#allocation9], 0
    %14 = vsyncpa [#allocation12], 0
    %15 = vsyncpa [#allocation5], 0
    // Predicated region
    $region2: #{tpu_custom_call.1} parent=1 // pred_check
      _
    $region3: #{tpu_custom_call.1} parent=1 // pred_check_branch
      %17 = sbr.rel (0) target = $region5
    $region4: #{tpu_custom_call.1} parent=1 // pred_region
      %s19 = ssub.s32 16, 16
      %20 = vsyncadd [#allocation6], %s19
      %23 = dma.hbm_to_smem %s0, 16, [#allocation3], [#allocation6]
    $region5: #{tpu_custom_call.1} parent=1 // pred_fallthru
      _
    // Predicated region
    $region6: #{tpu_custom_call.1} parent=1 // pred_check
      _
    $region7: #{tpu_custom_call.1} parent=1 // pred_check_branch
      %25 = sbr.rel (0) target = $region9
    $region8: #{tpu_custom_call.1} parent=1 // pred_region
      %s27 = ssub.s32 4096, 4096
      %28 = vsyncadd [#allocation4], %s27
      %s29 = sshll.u32 [#allocation7], 4
      %s30 = int_to_ptr.vmem [resolvable:$true] %s29
      %35 = dma.hbm_to_vmem [thread:$0]  %s1, 4096, %s30, [#allocation4], 128, 128, 8
    $region9: #{tpu_custom_call.1} parent=1 // pred_fallthru
      _
    // Predicated region
    $region10: #{tpu_custom_call.1} parent=1 // pred_check
      _
    $region11: #{tpu_custom_call.1} parent=1 // pred_check_branch
      %37 = sbr.rel (0) target = $region13
    $region12: #{tpu_custom_call.1} parent=1 // pred_region
      %s39 = ssub.s32 2048, 2048
      %40 = vsyncadd [#allocation9], %s39
      %s41 = sshll.u32 [#allocation8], 4
      %s42 = int_to_ptr.vmem [resolvable:$true] %s41
      %47 = dma.hbm_to_vmem [thread:$0]  %s2, 2048, %s42, [#allocation9], 64, 64, 4
    $region13: #{tpu_custom_call.1} parent=1 // pred_fallthru
      _
    // Predicated region
    $region14: #{tpu_custom_call.1} parent=1 // pred_check
      _
    $region15: #{tpu_custom_call.1} parent=1 // pred_check_branch
      %49 = sbr.rel (0) target = $region17
    $region16: #{tpu_custom_call.1} parent=1 // pred_region
      %s51 = ssub.s32 1024, 1024
      %52 = vsyncadd [#allocation9], %s51
      %s53 = sshll.u32 [#allocation10], 4
      %s54 = int_to_ptr.vmem [resolvable:$true] %s53
      %59 = dma.hbm_to_vmem [thread:$0]  %s3, 1024, %s54, [#allocation9], 64, 64, 4
    $region17: #{tpu_custom_call.1} parent=1 // pred_fallthru
      _
    // Predicated region
    $region18: #{tpu_custom_call.1} parent=1 // pred_check
      _
    $region19: #{tpu_custom_call.1} parent=1 // pred_check_branch
      %61 = sbr.rel (0) target = $region21
    $region20: #{tpu_custom_call.1} parent=1 // pred_region
      _
    $region21: #{tpu_custom_call.1} parent=1 // pred_fallthru
      _
    // Predicated region
    $region22: #{tpu_custom_call.1} parent=1 // pred_check
      _
    $region23: #{tpu_custom_call.1} parent=1 // pred_check_branch
      %63 = sbr.rel (0) target = $region25
    $region24: #{tpu_custom_call.1} parent=1 // pred_region
      %s65 = ssub.s32 4096, 4096
      %66 = vsyncadd [#allocation12], %s65
      %s67 = sshll.u32 [#allocation11], 4
      %s68 = int_to_ptr.vmem [resolvable:$true] %s67
      %73 = dma.hbm_to_vmem [thread:$0]  %s5, 4096, %s68, [#allocation12], 128, 128, 8
    $region25: #{tpu_custom_call.1} parent=1 // pred_fallthru
      _
    // Predicated region
    $region26: #{tpu_custom_call.1} parent=1 // pred_check
      _
    $region27: #{tpu_custom_call.1} parent=1 // pred_check_branch
      %75 = sbr.rel (0) target = $region29
    $region28: #{tpu_custom_call.1} parent=1 // pred_region
      %76 = dma.done [#allocation6], 16
    $region29: #{tpu_custom_call.1} parent=1 // pred_fallthru
      _
    // Predicated region
    $region30: #{tpu_custom_call.1} parent=1 // pred_check
      _
    $region31: #{tpu_custom_call.1} parent=1 // pred_check_branch
      %78 = sbr.rel (0) target = $region33
    $region32: #{tpu_custom_call.1} parent=1 // pred_region
      %79 = dma.done [#allocation4], 4096
    $region33: #{tpu_custom_call.1} parent=1 // pred_fallthru
      _
    // Predicated region
    $region34: #{tpu_custom_call.1} parent=1 // pred_check
      _
    $region35: #{tpu_custom_call.1} parent=1 // pred_check_branch
      %81 = sbr.rel (0) target = $region37
    $region36: #{tpu_custom_call.1} parent=1 // pred_region
      %82 = dma.done [#allocation9], 2048
    $region37: #{tpu_custom_call.1} parent=1 // pred_fallthru
      _
    // Predicated region
    $region38: #{tpu_custom_call.1} parent=1 // pred_check
      _
    $region39: #{tpu_custom_call.1} parent=1 // pred_check_branch
      %84 = sbr.rel (0) target = $region41
    $region40: #{tpu_custom_call.1} parent=1 // pred_region
      %85 = dma.done [#allocation9], 1024
    $region41: #{tpu_custom_call.1} parent=1 // pred_fallthru
      _
    // Predicated region
    $region42: #{tpu_custom_call.1} parent=1 // pred_check
      _
    $region43: #{tpu_custom_call.1} parent=1 // pred_check_branch
      %87 = sbr.rel (0) target = $region45
    $region44: #{tpu_custom_call.1} parent=1 // pred_region
      %88 = dma.done [#allocation12], 4096
    $region45: #{tpu_custom_call.1} parent=1 // pred_fallthru
      _
    %89 = sfence
    %p91 = scmp.eq.s32.totalorder 0, 0
    // Predicated region
    $region46: #{tpu_custom_call.1} parent=1 // pred_check
      %p92 = pneg %p91
    $region47: #{tpu_custom_call.1} parent=1 // pred_check_branch
      %94 = sbr.rel (%p92) target = $region49
    $region48: #{tpu_custom_call.1} parent=1 // pred_region
      %95 = vst [vmem:[#allocation2] sm:$0xff] 0.0
      %96 = vst [vmem:[#allocation2 + $0x8] sm:$0xff] 0.0
      %97 = vst [vmem:[#allocation2 + $0x10] sm:$0xff] 0.0
      %98 = vst [vmem:[#allocation2 + $0x18] sm:$0xff] 0.0
      %99 = vst [vmem:[#allocation2 + $0x20] sm:$0xff] 0.0
      %100 = vst [vmem:[#allocation2 + $0x28] sm:$0xff] 0.0
      %101 = vst [vmem:[#allocation2 + $0x30] sm:$0xff] 0.0
      %102 = vst [vmem:[#allocation2 + $0x38] sm:$0xff] 0.0
      %103 = vst [vmem:[#allocation2 + $0x40] sm:$0xff] 0.0
      %104 = vst [vmem:[#allocation2 + $0x48] sm:$0xff] 0.0
      %105 = vst [vmem:[#allocation2 + $0x50] sm:$0xff] 0.0
      %106 = vst [vmem:[#allocation2 + $0x58] sm:$0xff] 0.0
      %107 = vst [vmem:[#allocation2 + $0x60] sm:$0xff] 0.0
      %108 = vst [vmem:[#allocation2 + $0x68] sm:$0xff] 0.0
      %109 = vst [vmem:[#allocation2 + $0x70] sm:$0xff] 0.0
      %110 = vst [vmem:[#allocation2 + $0x78] sm:$0xff] 0.0
      %111 = vst [vmem:[#allocation2 + $0x80] sm:$0xff] 0.0
      %112 = vst [vmem:[#allocation2 + $0x88] sm:$0xff] 0.0
      %113 = vst [vmem:[#allocation2 + $0x90] sm:$0xff] 0.0
      %114 = vst [vmem:[#allocation2 + $0x98] sm:$0xff] 0.0
      %115 = vst [vmem:[#allocation2 + $0xa0] sm:$0xff] 0.0
      %116 = vst [vmem:[#allocation2 + $0xa8] sm:$0xff] 0.0
      %117 = vst [vmem:[#allocation2 + $0xb0] sm:$0xff] 0.0
      %118 = vst [vmem:[#allocation2 + $0xb8] sm:$0xff] 0.0
      %119 = vst [vmem:[#allocation2 + $0xc0] sm:$0xff] 0.0
      %120 = vst [vmem:[#allocation2 + $0xc8] sm:$0xff] 0.0
      %121 = vst [vmem:[#allocation2 + $0xd0] sm:$0xff] 0.0
      %122 = vst [vmem:[#allocation2 + $0xd8] sm:$0xff] 0.0
      %123 = vst [vmem:[#allocation2 + $0xe0] sm:$0xff] 0.0
      %124 = vst [vmem:[#allocation2 + $0xe8] sm:$0xff] 0.0
      %125 = vst [vmem:[#allocation2 + $0xf0] sm:$0xff] 0.0
      %126 = vst [vmem:[#allocation2 + $0xf8] sm:$0xff] 0.0
    $region49: #{tpu_custom_call.1} parent=1 // pred_fallthru
      _
    %v127 = vld [vmem:[#allocation2] sm:$0xff]
    %v128 = vld [vmem:[#allocation2 + $0x8] sm:$0xff]
    %v129 = vld [vmem:[#allocation2 + $0x10] sm:$0xff]
    %v130 = vld [vmem:[#allocation2 + $0x18] sm:$0xff]
    %v131 = vld [vmem:[#allocation2 + $0x20] sm:$0xff]
    %v132 = vld [vmem:[#allocation2 + $0x28] sm:$0xff]
    %v133 = vld [vmem:[#allocation2 + $0x30] sm:$0xff]
    %v134 = vld [vmem:[#allocation2 + $0x38] sm:$0xff]
    %v135 = vld [vmem:[#allocation2 + $0x40] sm:$0xff]
    %v136 = vld [vmem:[#allocation2 + $0x48] sm:$0xff]
    %v137 = vld [vmem:[#allocation2 + $0x50] sm:$0xff]
    %v138 = vld [vmem:[#allocation2 + $0x58] sm:$0xff]
    %v139 = vld [vmem:[#allocation2 + $0x60] sm:$0xff]
    %v140 = vld [vmem:[#allocation2 + $0x68] sm:$0xff]
    %v141 = vld [vmem:[#allocation2 + $0x70] sm:$0xff]
    %v142 = vld [vmem:[#allocation2 + $0x78] sm:$0xff]
    %v143 = vld [vmem:[#allocation2 + $0x80] sm:$0xff]
    %v144 = vld [vmem:[#allocation2 + $0x88] sm:$0xff]
    %v145 = vld [vmem:[#allocation2 + $0x90] sm:$0xff]
    %v146 = vld [vmem:[#allocation2 + $0x98] sm:$0xff]
    %v147 = vld [vmem:[#allocation2 + $0xa0] sm:$0xff]
    %v148 = vld [vmem:[#allocation2 + $0xa8] sm:$0xff]
    %v149 = vld [vmem:[#allocation2 + $0xb0] sm:$0xff]
    %v150 = vld [vmem:[#allocation2 + $0xb8] sm:$0xff]
    %v151 = vld [vmem:[#allocation2 + $0xc0] sm:$0xff]
    %v152 = vld [vmem:[#allocation2 + $0xc8] sm:$0xff]
    %v153 = vld [vmem:[#allocation2 + $0xd0] sm:$0xff]
    %v154 = vld [vmem:[#allocation2 + $0xd8] sm:$0xff]
    %v155 = vld [vmem:[#allocation2 + $0xe0] sm:$0xff]
    %v156 = vld [vmem:[#allocation2 + $0xe8] sm:$0xff]
    %v157 = vld [vmem:[#allocation2 + $0xf0] sm:$0xff]
    %v158 = vld [vmem:[#allocation2 + $0xf8] sm:$0xff]
    %v159 = vld [vmem:[#allocation7] sm:$0xff]
    %v160 = vld [vmem:[#allocation7 + $0x8] sm:$0xff]
    %v161 = vld [vmem:[#allocation7 + $0x10] sm:$0xff]
    %v162 = vld [vmem:[#allocation7 + $0x18] sm:$0xff]
    %v163 = vld [vmem:[#allocation7 + $0x20] sm:$0xff]
    %v164 = vld [vmem:[#allocation7 + $0x28] sm:$0xff]
    %v165 = vld [vmem:[#allocation7 + $0x30] sm:$0xff]
    %v166 = vld [vmem:[#allocation7 + $0x38] sm:$0xff]
    %v167 = vld [vmem:[#allocation7 + $0x40] sm:$0xff]
    %v168 = vld [vmem:[#allocation7 + $0x48] sm:$0xff]
    %v169 = vld [vmem:[#allocation7 + $0x50] sm:$0xff]
    %v170 = vld [vmem:[#allocation7 + $0x58] sm:$0xff]
    %v171 = vld [vmem:[#allocation7 + $0x60] sm:$0xff]
    %v172 = vld [vmem:[#allocation7 + $0x68] sm:$0xff]
    %v173 = vld [vmem:[#allocation7 + $0x70] sm:$0xff]
    %v174 = vld [vmem:[#allocation7 + $0x78] sm:$0xff]
    %v175 = vld [vmem:[#allocation7 + $0x80] sm:$0xff]
    %v176 = vld [vmem:[#allocation7 + $0x88] sm:$0xff]
    %v177 = vld [vmem:[#allocation7 + $0x90] sm:$0xff]
    %v178 = vld [vmem:[#allocation7 + $0x98] sm:$0xff]
    %v179 = vld [vmem:[#allocation7 + $0xa0] sm:$0xff]
    %v180 = vld [vmem:[#allocation7 + $0xa8] sm:$0xff]
    %v181 = vld [vmem:[#allocation7 + $0xb0] sm:$0xff]
    %v182 = vld [vmem:[#allocation7 + $0xb8] sm:$0xff]
    %v183 = vld [vmem:[#allocation7 + $0xc0] sm:$0xff]
    %v184 = vld [vmem:[#allocation7 + $0xc8] sm:$0xff]
    %v185 = vld [vmem:[#allocation7 + $0xd0] sm:$0xff]
    %v186 = vld [vmem:[#allocation7 + $0xd8] sm:$0xff]
    %v187 = vld [vmem:[#allocation7 + $0xe0] sm:$0xff]
    %v188 = vld [vmem:[#allocation7 + $0xe8] sm:$0xff]
    %v189 = vld [vmem:[#allocation7 + $0xf0] sm:$0xff]
    %v190 = vld [vmem:[#allocation7 + $0xf8] sm:$0xff]
    %v191 = vld [vmem:[#allocation8] sm:$0xf]
    %v192 = vld [vmem:[#allocation8 + $0x4] sm:$0xf]
    %v193 = vld [vmem:[#allocation8 + $0x8] sm:$0xf]
    %v194 = vld [vmem:[#allocation8 + $0xc] sm:$0xf]
    %v195 = vld [vmem:[#allocation8 + $0x10] sm:$0xf]
    %v196 = vld [vmem:[#allocation8 + $0x14] sm:$0xf]
    %v197 = vld [vmem:[#allocation8 + $0x18] sm:$0xf]
    %v198 = vld [vmem:[#allocation8 + $0x1c] sm:$0xf]
    %v199 = vld [vmem:[#allocation8 + $0x20] sm:$0xf]
    %v200 = vld [vmem:[#allocation8 + $0x24] sm:$0xf]
    %v201 = vld [vmem:[#allocation8 + $0x28] sm:$0xf]
    %v202 = vld [vmem:[#allocation8 + $0x2c] sm:$0xf]
    %v203 = vld [vmem:[#allocation8 + $0x30] sm:$0xf]
    %v204 = vld [vmem:[#allocation8 + $0x34] sm:$0xf]
    %v205 = vld [vmem:[#allocation8 + $0x38] sm:$0xf]
    %v206 = vld [vmem:[#allocation8 + $0x3c] sm:$0xf]
    %v207 = vld [vmem:[#allocation8 + $0x40] sm:$0xf]
    %v208 = vld [vmem:[#allocation8 + $0x44] sm:$0xf]
    %v209 = vld [vmem:[#allocation8 + $0x48] sm:$0xf]
    %v210 = vld [vmem:[#allocation8 + $0x4c] sm:$0xf]
    %v211 = vld [vmem:[#allocation8 + $0x50] sm:$0xf]
    %v212 = vld [vmem:[#allocation8 + $0x54] sm:$0xf]
    %v213 = vld [vmem:[#allocation8 + $0x58] sm:$0xf]
    %v214 = vld [vmem:[#allocation8 + $0x5c] sm:$0xf]
    %v215 = vld [vmem:[#allocation8 + $0x60] sm:$0xf]
    %v216 = vld [vmem:[#allocation8 + $0x64] sm:$0xf]
    %v217 = vld [vmem:[#allocation8 + $0x68] sm:$0xf]
    %v218 = vld [vmem:[#allocation8 + $0x6c] sm:$0xf]
    %v219 = vld [vmem:[#allocation8 + $0x70] sm:$0xf]
    %v220 = vld [vmem:[#allocation8 + $0x74] sm:$0xf]
    %v221 = vld [vmem:[#allocation8 + $0x78] sm:$0xf]
    %v222 = vld [vmem:[#allocation8 + $0x7c] sm:$0xf]
    %v255 = vunpack.c.l.b16 %v159
    %v256 = vunpack.c.h.b16 %v159
    %v257 = vunpack.c.l.b16 %v160
    %v258 = vunpack.c.h.b16 %v160
    %v259 = vunpack.c.l.b16 %v161
    %v260 = vunpack.c.h.b16 %v161
    %v261 = vunpack.c.l.b16 %v162
    %v262 = vunpack.c.h.b16 %v162
    %v263 = vunpack.c.l.b16 %v163
    %v264 = vunpack.c.h.b16 %v163
    %v265 = vunpack.c.l.b16 %v164
    %v266 = vunpack.c.h.b16 %v164
    %v267 = vunpack.c.l.b16 %v165
    %v268 = vunpack.c.h.b16 %v165
    %v269 = vunpack.c.l.b16 %v166
    %v270 = vunpack.c.h.b16 %v166
    %v271 = vunpack.c.l.b16 %v167
    %v272 = vunpack.c.h.b16 %v167
    %v273 = vunpack.c.l.b16 %v168
    %v274 = vunpack.c.h.b16 %v168
    %v275 = vunpack.c.l.b16 %v169
    %v276 = vunpack.c.h.b16 %v169
    %v277 = vunpack.c.l.b16 %v170
    %v278 = vunpack.c.h.b16 %v170
    %v279 = vunpack.c.l.b16 %v171
    %v280 = vunpack.c.h.b16 %v171
    %v281 = vunpack.c.l.b16 %v172
    %v282 = vunpack.c.h.b16 %v172
    %v283 = vunpack.c.l.b16 %v173
    %v284 = vunpack.c.h.b16 %v173
    %v285 = vunpack.c.l.b16 %v174
    %v286 = vunpack.c.h.b16 %v174
    %v287 = vunpack.c.l.b16 %v175
    %v288 = vunpack.c.h.b16 %v175
    %v289 = vunpack.c.l.b16 %v176
    %v290 = vunpack.c.h.b16 %v176
    %v291 = vunpack.c.l.b16 %v177
    %v292 = vunpack.c.h.b16 %v177
    %v293 = vunpack.c.l.b16 %v178
    %v294 = vunpack.c.h.b16 %v178
    %v295 = vunpack.c.l.b16 %v179
    %v296 = vunpack.c.h.b16 %v179
    %v297 = vunpack.c.l.b16 %v180
    %v298 = vunpack.c.h.b16 %v180
    %v299 = vunpack.c.l.b16 %v181
    %v300 = vunpack.c.h.b16 %v181
    %v301 = vunpack.c.l.b16 %v182
    %v302 = vunpack.c.h.b16 %v182
    %v303 = vunpack.c.l.b16 %v183
    %v304 = vunpack.c.h.b16 %v183
    %v305 = vunpack.c.l.b16 %v184
    %v306 = vunpack.c.h.b16 %v184
    %v307 = vunpack.c.l.b16 %v185
    %v308 = vunpack.c.h.b16 %v185
    %v309 = vunpack.c.l.b16 %v186
    %v310 = vunpack.c.h.b16 %v186
    %v311 = vunpack.c.l.b16 %v187
    %v312 = vunpack.c.h.b16 %v187
    %v313 = vunpack.c.l.b16 %v188
    %v314 = vunpack.c.h.b16 %v188
    %v315 = vunpack.c.l.b16 %v189
    %v316 = vunpack.c.h.b16 %v189
    %v317 = vunpack.c.l.b16 %v190
    %v318 = vunpack.c.h.b16 %v190
    %v319 = vpack.c.b16 %v257, %v255
    %v320 = vpack.c.b16 %v258, %v256
    %v321 = vpack.c.b16 %v261, %v259
    %v322 = vpack.c.b16 %v262, %v260
    %v323 = vpack.c.b16 %v265, %v263
    %v324 = vpack.c.b16 %v266, %v264
    %v325 = vpack.c.b16 %v269, %v267
    %v326 = vpack.c.b16 %v270, %v268
    %v327 = vpack.c.b16 %v273, %v271
    %v328 = vpack.c.b16 %v274, %v272
    %v329 = vpack.c.b16 %v277, %v275
    %v330 = vpack.c.b16 %v278, %v276
    %v331 = vpack.c.b16 %v281, %v279
    %v332 = vpack.c.b16 %v282, %v280
    %v333 = vpack.c.b16 %v285, %v283
    %v334 = vpack.c.b16 %v286, %v284
    %v335 = vpack.c.b16 %v289, %v287
    %v336 = vpack.c.b16 %v290, %v288
    %v337 = vpack.c.b16 %v293, %v291
    %v338 = vpack.c.b16 %v294, %v292
    %v339 = vpack.c.b16 %v297, %v295
    %v340 = vpack.c.b16 %v298, %v296
    %v341 = vpack.c.b16 %v301, %v299
    %v342 = vpack.c.b16 %v302, %v300
    %v343 = vpack.c.b16 %v305, %v303
    %v344 = vpack.c.b16 %v306, %v304
    %v345 = vpack.c.b16 %v309, %v307
    %v346 = vpack.c.b16 %v310, %v308
    %v347 = vpack.c.b16 %v313, %v311
    %v348 = vpack.c.b16 %v314, %v312
    %v349 = vpack.c.b16 %v317, %v315
    %v350 = vpack.c.b16 %v318, %v316
    %v415 = vunpack.c.l.b16 %v191
    %v416 = vunpack.c.l.b16 %v192
    %v417 = vunpack.c.l.b16 %v193
    %v418 = vunpack.c.l.b16 %v194
    %v419 = vunpack.c.l.b16 %v195
    %v420 = vunpack.c.l.b16 %v196
    %v421 = vunpack.c.l.b16 %v197
    %v422 = vunpack.c.l.b16 %v198
    %v423 = vunpack.c.l.b16 %v199
    %v424 = vunpack.c.l.b16 %v200
    %v425 = vunpack.c.l.b16 %v201
    %v426 = vunpack.c.l.b16 %v202
    %v427 = vunpack.c.l.b16 %v203
    %v428 = vunpack.c.l.b16 %v204
    %v429 = vunpack.c.l.b16 %v205
    %v430 = vunpack.c.l.b16 %v206
    %v431 = vunpack.c.l.b16 %v207
    %v432 = vunpack.c.l.b16 %v208
    %v433 = vunpack.c.l.b16 %v209
    %v434 = vunpack.c.l.b16 %v210
    %v435 = vunpack.c.l.b16 %v211
    %v436 = vunpack.c.l.b16 %v212
    %v437 = vunpack.c.l.b16 %v213
    %v438 = vunpack.c.l.b16 %v214
    %v439 = vunpack.c.l.b16 %v215
    %v440 = vunpack.c.l.b16 %v216
    %v441 = vunpack.c.l.b16 %v217
    %v442 = vunpack.c.l.b16 %v218
    %v443 = vunpack.c.l.b16 %v219
    %v444 = vunpack.c.l.b16 %v220
    %v445 = vunpack.c.l.b16 %v221
    %v446 = vunpack.c.l.b16 %v222
    %v447 = vpack.c.b16 %v416, %v415
    %v448 = vpack.c.b16 %v418, %v417
    %v449 = vpack.c.b16 %v420, %v419
    %v450 = vpack.c.b16 %v422, %v421
    %v451 = vpack.c.b16 %v424, %v423
    %v452 = vpack.c.b16 %v426, %v425
    %v453 = vpack.c.b16 %v428, %v427
    %v454 = vpack.c.b16 %v430, %v429
    %v455 = vpack.c.b16 %v432, %v431
    %v456 = vpack.c.b16 %v434, %v433
    %v457 = vpack.c.b16 %v436, %v435
    %v458 = vpack.c.b16 %v438, %v437
    %v459 = vpack.c.b16 %v440, %v439
    %v460 = vpack.c.b16 %v442, %v441
    %v461 = vpack.c.b16 %v444, %v443
    %v462 = vpack.c.b16 %v446, %v445
    %479 = vmatprep.subr.bf16.mxu0 0
    %480 = vmatpush1.bf16.msra.mxu0 %v447
    %481 = vmatprep.subr.bf16.mxu0 0
    %482 = vmatpush1.bf16.msra.mxu0 %v448
    %483 = vmatprep.subr.bf16.mxu0 0
    %484 = vmatpush1.bf16.msra.mxu0 %v449
    %485 = vmatprep.subr.bf16.mxu0 0
    %486 = vmatpush1.bf16.msra.mxu0 %v450
    %487 = vmatprep.subr.bf16.mxu0 0
    %488 = vmatpush1.bf16.msra.mxu0 %v451
    %489 = vmatprep.subr.bf16.mxu0 0
    %490 = vmatpush1.bf16.msra.mxu0 %v452
    %491 = vmatprep.subr.bf16.mxu0 0
    %492 = vmatpush1.bf16.msra.mxu0 %v453
    %493 = vmatprep.subr.bf16.mxu0 0
    %494 = vmatpush1.bf16.msra.mxu0 %v454
    %495 = vmatprep.subr.bf16.mxu0 0
    %496 = vmatpush1.bf16.msra.mxu0 %v455
    %497 = vmatprep.subr.bf16.mxu0 0
    %498 = vmatpush1.bf16.msra.mxu0 %v456
    %499 = vmatprep.subr.bf16.mxu0 0
    %500 = vmatpush1.bf16.msra.mxu0 %v457
    %501 = vmatprep.subr.bf16.mxu0 0
    %502 = vmatpush1.bf16.msra.mxu0 %v458
    %503 = vmatprep.subr.bf16.mxu0 0
    %504 = vmatpush1.bf16.msra.mxu0 %v459
    %505 = vmatprep.subr.bf16.mxu0 0
    %506 = vmatpush1.bf16.msra.mxu0 %v460
    %507 = vmatprep.subr.bf16.mxu0 0
    %508 = vmatpush1.bf16.msra.mxu0 %v461
    %509 = vmatprep.subr.bf16.mxu0 0
    %510 = vmatpush1.bf16.msra.mxu0 %v462
    %511 = vmatprep.mubr.bf16.mxu0 %v320
    %512 = vmatmul.mubr.bf16.gmra.mrb[0].mxu0 %v319
    %v513 = vpop.f32.mrb[0].mxu0
    %v514 = vadd.f32 0.0, %v513
    %v515 = vpop.f32.mrb[0].mxu0
    %v516 = vpop.f32.mrb[0].mxu0
    %v517 = vadd.f32 0.0, %v516
    %v518 = vpop.f32.mrb[0].mxu0
    %519 = vmatprep.mubr.bf16.mxu0 %v322
    %520 = vmatmul.mubr.bf16.gmra.mrb[0].mxu0 %v321
    %v521 = vpop.f32.mrb[0].mxu0
    %v522 = vadd.f32 0.0, %v521
    %v523 = vpop.f32.mrb[0].mxu0
    %v524 = vpop.f32.mrb[0].mxu0
    %v525 = vadd.f32 0.0, %v524
    %v526 = vpop.f32.mrb[0].mxu0
    %527 = vmatprep.mubr.bf16.mxu0 %v324
    %528 = vmatmul.mubr.bf16.gmra.mrb[0].mxu0 %v323
    %v529 = vpop.f32.mrb[0].mxu0
    %v530 = vadd.f32 0.0, %v529
    %v531 = vpop.f32.mrb[0].mxu0
    %v532 = vpop.f32.mrb[0].mxu0
    %v533 = vadd.f32 0.0, %v532
    %v534 = vpop.f32.mrb[0].mxu0
    %535 = vmatprep.mubr.bf16.mxu0 %v326
    %536 = vmatmul.mubr.bf16.gmra.mrb[0].mxu0 %v325
    %v537 = vpop.f32.mrb[0].mxu0
    %v538 = vadd.f32 0.0, %v537
    %v539 = vpop.f32.mrb[0].mxu0
    %v540 = vpop.f32.mrb[0].mxu0
    %v541 = vadd.f32 0.0, %v540
    %v542 = vpop.f32.mrb[0].mxu0
    %543 = vmatprep.mubr.bf16.mxu0 %v328
    %544 = vmatmul.mubr.bf16.gmra.mrb[0].mxu0 %v327
    %v545 = vpop.f32.mrb[0].mxu0
    %v546 = vadd.f32 0.0, %v545
    %v547 = vpop.f32.mrb[0].mxu0
    %v548 = vpop.f32.mrb[0].mxu0
    %v549 = vadd.f32 0.0, %v548
    %v550 = vpop.f32.mrb[0].mxu0
    %551 = vmatprep.mubr.bf16.mxu0 %v330
    %552 = vmatmul.mubr.bf16.gmra.mrb[0].mxu0 %v329
    %v553 = vpop.f32.mrb[0].mxu0
    %v554 = vadd.f32 0.0, %v553
    %v555 = vpop.f32.mrb[0].mxu0
    %v556 = vpop.f32.mrb[0].mxu0
    %v557 = vadd.f32 0.0, %v556
    %v558 = vpop.f32.mrb[0].mxu0
    %559 = vmatprep.mubr.bf16.mxu0 %v332
    %560 = vmatmul.mubr.bf16.gmra.mrb[0].mxu0 %v331
    %v561 = vpop.f32.mrb[0].mxu0
    %v562 = vadd.f32 0.0, %v561
    %v563 = vpop.f32.mrb[0].mxu0
    %v564 = vpop.f32.mrb[0].mxu0
    %v565 = vadd.f32 0.0, %v564
    %v566 = vpop.f32.mrb[0].mxu0
    %567 = vmatprep.mubr.bf16.mxu0 %v334
    %568 = vmatmul.mubr.bf16.gmra.mrb[0].mxu0 %v333
    %v569 = vpop.f32.mrb[0].mxu0
    %v570 = vadd.f32 0.0, %v569
    %v571 = vpop.f32.mrb[0].mxu0
    %v572 = vpop.f32.mrb[0].mxu0
    %v573 = vadd.f32 0.0, %v572
    %v574 = vpop.f32.mrb[0].mxu0
    %575 = vmatprep.mubr.bf16.mxu0 %v336
    %576 = vmatmul.mubr.bf16.gmra.mrb[0].mxu0 %v335
    %v577 = vpop.f32.mrb[0].mxu0
    %v578 = vadd.f32 0.0, %v577
    %v579 = vpop.f32.mrb[0].mxu0
    %v580 = vpop.f32.mrb[0].mxu0
    %v581 = vadd.f32 0.0, %v580
    %v582 = vpop.f32.mrb[0].mxu0
    %583 = vmatprep.mubr.bf16.mxu0 %v338
    %584 = vmatmul.mubr.bf16.gmra.mrb[0].mxu0 %v337
    %v585 = vpop.f32.mrb[0].mxu0
    %v586 = vadd.f32 0.0, %v585
    %v587 = vpop.f32.mrb[0].mxu0
    %v588 = vpop.f32.mrb[0].mxu0
    %v589 = vadd.f32 0.0, %v588
    %v590 = vpop.f32.mrb[0].mxu0
    %591 = vmatprep.mubr.bf16.mxu0 %v340
    %592 = vmatmul.mubr.bf16.gmra.mrb[0].mxu0 %v339
    %v593 = vpop.f32.mrb[0].mxu0
    %v594 = vadd.f32 0.0, %v593
    %v595 = vpop.f32.mrb[0].mxu0
    %v596 = vpop.f32.mrb[0].mxu0
    %v597 = vadd.f32 0.0, %v596
    %v598 = vpop.f32.mrb[0].mxu0
    %599 = vmatprep.mubr.bf16.mxu0 %v342
    %600 = vmatmul.mubr.bf16.gmra.mrb[0].mxu0 %v341
    %v601 = vpop.f32.mrb[0].mxu0
    %v602 = vadd.f32 0.0, %v601
    %v603 = vpop.f32.mrb[0].mxu0
    %v604 = vpop.f32.mrb[0].mxu0
    %v605 = vadd.f32 0.0, %v604
    %v606 = vpop.f32.mrb[0].mxu0
    %607 = vmatprep.mubr.bf16.mxu0 %v344
    %608 = vmatmul.mubr.bf16.gmra.mrb[0].mxu0 %v343
    %v609 = vpop.f32.mrb[0].mxu0
    %v610 = vadd.f32 0.0, %v609
    %v611 = vpop.f32.mrb[0].mxu0
    %v612 = vpop.f32.mrb[0].mxu0
    %v613 = vadd.f32 0.0, %v612
    %v614 = vpop.f32.mrb[0].mxu0
    %615 = vmatprep.mubr.bf16.mxu0 %v346
    %616 = vmatmul.mubr.bf16.gmra.mrb[0].mxu0 %v345
    %v617 = vpop.f32.mrb[0].mxu0
    %v618 = vadd.f32 0.0, %v617
    %v619 = vpop.f32.mrb[0].mxu0
    %v620 = vpop.f32.mrb[0].mxu0
    %v621 = vadd.f32 0.0, %v620
    %v622 = vpop.f32.mrb[0].mxu0
    %623 = vmatprep.mubr.bf16.mxu0 %v348
    %624 = vmatmul.mubr.bf16.gmra.mrb[0].mxu0 %v347
    %v625 = vpop.f32.mrb[0].mxu0
    %v626 = vadd.f32 0.0, %v625
    %v627 = vpop.f32.mrb[0].mxu0
    %v628 = vpop.f32.mrb[0].mxu0
    %v629 = vadd.f32 0.0, %v628
    %v630 = vpop.f32.mrb[0].mxu0
    %631 = vmatprep.mubr.bf16.mxu0 %v350
    %632 = vmatmul.mubr.bf16.gmra.mrb[0].mxu0 %v349
    %v633 = vpop.f32.mrb[0].mxu0
    %v634 = vadd.f32 0.0, %v633
    %v635 = vpop.f32.mrb[0].mxu0
    %v636 = vpop.f32.mrb[0].mxu0
    %v637 = vadd.f32 0.0, %v636
    %v638 = vpop.f32.mrb[0].mxu0
    %639 = vdwg.mxu0
    %v640 = vadd.f32 %v127, %v514
    %v641 = vadd.f32 %v128, %v517
    %v642 = vadd.f32 %v129, %v522
    %v643 = vadd.f32 %v130, %v525
    %v644 = vadd.f32 %v131, %v530
    %v645 = vadd.f32 %v132, %v533
    %v646 = vadd.f32 %v133, %v538
    %v647 = vadd.f32 %v134, %v541
    %v648 = vadd.f32 %v135, %v546
    %v649 = vadd.f32 %v136, %v549
    %v650 = vadd.f32 %v137, %v554
    %v651 = vadd.f32 %v138, %v557
    %v652 = vadd.f32 %v139, %v562
    %v653 = vadd.f32 %v140, %v565
    %v654 = vadd.f32 %v141, %v570
    %v655 = vadd.f32 %v142, %v573
    %v656 = vadd.f32 %v143, %v578
    %v657 = vadd.f32 %v144, %v581
    %v658 = vadd.f32 %v145, %v586
    %v659 = vadd.f32 %v146, %v589
    %v660 = vadd.f32 %v147, %v594
    %v661 = vadd.f32 %v148, %v597
    %v662 = vadd.f32 %v149, %v602
    %v663 = vadd.f32 %v150, %v605
    %v664 = vadd.f32 %v151, %v610
    %v665 = vadd.f32 %v152, %v613
    %v666 = vadd.f32 %v153, %v618
    %v667 = vadd.f32 %v154, %v621
    %v668 = vadd.f32 %v155, %v626
    %v669 = vadd.f32 %v156, %v629
    %v670 = vadd.f32 %v157, %v634
    %v671 = vadd.f32 %v158, %v637
    %672 = vst [vmem:[#allocation2] sm:$0xff] %v640
    %673 = vst [vmem:[#allocation2 + $0x8] sm:$0xff] %v641
    %674 = vst [vmem:[#allocation2 + $0x10] sm:$0xff] %v642
    %675 = vst [vmem:[#allocation2 + $0x18] sm:$0xff] %v643
    %676 = vst [vmem:[#allocation2 + $0x20] sm:$0xff] %v644
    %677 = vst [vmem:[#allocation2 + $0x28] sm:$0xff] %v645
    %678 = vst [vmem:[#allocation2 + $0x30] sm:$0xff] %v646
    %679 = vst [vmem:[#allocation2 + $0x38] sm:$0xff] %v647
    %680 = vst [vmem:[#allocation2 + $0x40] sm:$0xff] %v648
    %681 = vst [vmem:[#allocation2 + $0x48] sm:$0xff] %v649
    %682 = vst [vmem:[#allocation2 + $0x50] sm:$0xff] %v650
    %683 = vst [vmem:[#allocation2 + $0x58] sm:$0xff] %v651
    %684 = vst [vmem:[#allocation2 + $0x60] sm:$0xff] %v652
    %685 = vst [vmem:[#allocation2 + $0x68] sm:$0xff] %v653
    %686 = vst [vmem:[#allocation2 + $0x70] sm:$0xff] %v654
    %687 = vst [vmem:[#allocation2 + $0x78] sm:$0xff] %v655
    %688 = vst [vmem:[#allocation2 + $0x80] sm:$0xff] %v656
    %689 = vst [vmem:[#allocation2 + $0x88] sm:$0xff] %v657
    %690 = vst [vmem:[#allocation2 + $0x90] sm:$0xff] %v658
    %691 = vst [vmem:[#allocation2 + $0x98] sm:$0xff] %v659
    %692 = vst [vmem:[#allocation2 + $0xa0] sm:$0xff] %v660
    %693 = vst [vmem:[#allocation2 + $0xa8] sm:$0xff] %v661
    %694 = vst [vmem:[#allocation2 + $0xb0] sm:$0xff] %v662
    %695 = vst [vmem:[#allocation2 + $0xb8] sm:$0xff] %v663
    %696 = vst [vmem:[#allocation2 + $0xc0] sm:$0xff] %v664
    %697 = vst [vmem:[#allocation2 + $0xc8] sm:$0xff] %v665
    %698 = vst [vmem:[#allocation2 + $0xd0] sm:$0xff] %v666
    %699 = vst [vmem:[#allocation2 + $0xd8] sm:$0xff] %v667
    %700 = vst [vmem:[#allocation2 + $0xe0] sm:$0xff] %v668
    %701 = vst [vmem:[#allocation2 + $0xe8] sm:$0xff] %v669
    %702 = vst [vmem:[#allocation2 + $0xf0] sm:$0xff] %v670
    %703 = vst [vmem:[#allocation2 + $0xf8] sm:$0xff] %v671
    // Predicated region
    $region50: #{tpu_custom_call.1} parent=1 // pred_check
      %p704 = pneg %p91
    $region51: #{tpu_custom_call.1} parent=1 // pred_check_branch
      %706 = sbr.rel (%p704) target = $region53
    $region52: #{tpu_custom_call.1} parent=1 // pred_region
      %v707 = vld [vmem:[#allocation2] sm:$0xff]
      %v708 = vld [vmem:[#allocation2 + $0x8] sm:$0xff]
      %v709 = vld [vmem:[#allocation2 + $0x10] sm:$0xff]
      %v710 = vld [vmem:[#allocation2 + $0x18] sm:$0xff]
      %v711 = vld [vmem:[#allocation2 + $0x20] sm:$0xff]
      %v712 = vld [vmem:[#allocation2 + $0x28] sm:$0xff]
      %v713 = vld [vmem:[#allocation2 + $0x30] sm:$0xff]
      %v714 = vld [vmem:[#allocation2 + $0x38] sm:$0xff]
      %v715 = vld [vmem:[#allocation2 + $0x40] sm:$0xff]
      %v716 = vld [vmem:[#allocation2 + $0x48] sm:$0xff]
      %v717 = vld [vmem:[#allocation2 + $0x50] sm:$0xff]
      %v718 = vld [vmem:[#allocation2 + $0x58] sm:$0xff]
      %v719 = vld [vmem:[#allocation2 + $0x60] sm:$0xff]
      %v720 = vld [vmem:[#allocation2 + $0x68] sm:$0xff]
      %v721 = vld [vmem:[#allocation2 + $0x70] sm:$0xff]
      %v722 = vld [vmem:[#allocation2 + $0x78] sm:$0xff]
      %v723 = vld [vmem:[#allocation2 + $0x80] sm:$0xff]
      %v724 = vld [vmem:[#allocation2 + $0x88] sm:$0xff]
      %v725 = vld [vmem:[#allocation2 + $0x90] sm:$0xff]
      %v726 = vld [vmem:[#allocation2 + $0x98] sm:$0xff]
      %v727 = vld [vmem:[#allocation2 + $0xa0] sm:$0xff]
      %v728 = vld [vmem:[#allocation2 + $0xa8] sm:$0xff]
      %v729 = vld [vmem:[#allocation2 + $0xb0] sm:$0xff]
      %v730 = vld [vmem:[#allocation2 + $0xb8] sm:$0xff]
      %v731 = vld [vmem:[#allocation2 + $0xc0] sm:$0xff]
      %v732 = vld [vmem:[#allocation2 + $0xc8] sm:$0xff]
      %v733 = vld [vmem:[#allocation2 + $0xd0] sm:$0xff]
      %v734 = vld [vmem:[#allocation2 + $0xd8] sm:$0xff]
      %v735 = vld [vmem:[#allocation2 + $0xe0] sm:$0xff]
      %v736 = vld [vmem:[#allocation2 + $0xe8] sm:$0xff]
      %v737 = vld [vmem:[#allocation2 + $0xf0] sm:$0xff]
      %v738 = vld [vmem:[#allocation2 + $0xf8] sm:$0xff]
      %v739 = vpack.c.bf16 %v708, %v707
      %v740 = vpack.c.bf16 %v710, %v709
      %v741 = vpack.c.bf16 %v712, %v711
      %v742 = vpack.c.bf16 %v714, %v713
      %v743 = vpack.c.bf16 %v716, %v715
      %v744 = vpack.c.bf16 %v718, %v717
      %v745 = vpack.c.bf16 %v720, %v719
      %v746 = vpack.c.bf16 %v722, %v721
      %v747 = vpack.c.bf16 %v724, %v723
      %v748 = vpack.c.bf16 %v726, %v725
      %v749 = vpack.c.bf16 %v728, %v727
      %v750 = vpack.c.bf16 %v730, %v729
      %v751 = vpack.c.bf16 %v732, %v731
      %v752 = vpack.c.bf16 %v734, %v733
      %v753 = vpack.c.bf16 %v736, %v735
      %v754 = vpack.c.bf16 %v738, %v737
      %v755 = vld [vmem:[#allocation10] sm:$0xf]
      %v756 = vld [vmem:[#allocation10 + $0x4] sm:$0xf]
      %v757 = vld [vmem:[#allocation10 + $0x8] sm:$0xf]
      %v758 = vld [vmem:[#allocation10 + $0xc] sm:$0xf]
      %v759 = vld [vmem:[#allocation10 + $0x10] sm:$0xf]
      %v760 = vld [vmem:[#allocation10 + $0x14] sm:$0xf]
      %v761 = vld [vmem:[#allocation10 + $0x18] sm:$0xf]
      %v762 = vld [vmem:[#allocation10 + $0x1c] sm:$0xf]
      %v763 = vld [vmem:[#allocation10 + $0x20] sm:$0xf]
      %v764 = vld [vmem:[#allocation10 + $0x24] sm:$0xf]
      %v765 = vld [vmem:[#allocation10 + $0x28] sm:$0xf]
      %v766 = vld [vmem:[#allocation10 + $0x2c] sm:$0xf]
      %v767 = vld [vmem:[#allocation10 + $0x30] sm:$0xf]
      %v768 = vld [vmem:[#allocation10 + $0x34] sm:$0xf]
      %v769 = vld [vmem:[#allocation10 + $0x38] sm:$0xf]
      %v770 = vld [vmem:[#allocation10 + $0x3c] sm:$0xf]
      %v771 = vld [vmem:[%s4] sm:$0x1]
      %v773 = vlaneseq
      %v774 = vshrl.u32 %v773, 7
      %v775 = vsub.s32 0, %v774
      %v776 = vrot.slane %v771, %v775
      %v794 = vunpack.c.l.b16 %v755
      %v795 = vunpack.c.l.b16 %v756
      %v796 = vunpack.c.l.b16 %v757
      %v797 = vunpack.c.l.b16 %v758
      %v798 = vunpack.c.l.b16 %v759
      %v799 = vunpack.c.l.b16 %v760
      %v800 = vunpack.c.l.b16 %v761
      %v801 = vunpack.c.l.b16 %v762
      %v802 = vunpack.c.l.b16 %v763
      %v803 = vunpack.c.l.b16 %v764
      %v804 = vunpack.c.l.b16 %v765
      %v805 = vunpack.c.l.b16 %v766
      %v806 = vunpack.c.l.b16 %v767
      %v807 = vunpack.c.l.b16 %v768
      %v808 = vunpack.c.l.b16 %v769
      %v809 = vunpack.c.l.b16 %v770
      %v810 = vpack.c.b16 %v795, %v794
      %v811 = vpack.c.b16 %v797, %v796
      %v812 = vpack.c.b16 %v799, %v798
      %v813 = vpack.c.b16 %v801, %v800
      %v814 = vpack.c.b16 %v803, %v802
      %v815 = vpack.c.b16 %v805, %v804
      %v816 = vpack.c.b16 %v807, %v806
      %v817 = vpack.c.b16 %v809, %v808
      %826 = vmatprep.subr.bf16.mxu0 0
      %827 = vmatpush1.bf16.xpose.msra.mxu0 %v810
      %828 = vmatprep.subr.bf16.mxu0 0
      %829 = vmatpush1.bf16.xpose.msra.mxu0 %v811
      %830 = vmatprep.subr.bf16.mxu0 0
      %831 = vmatpush1.bf16.xpose.msra.mxu0 %v812
      %832 = vmatprep.subr.bf16.mxu0 0
      %833 = vmatpush1.bf16.xpose.msra.mxu0 %v813
      %834 = vmatprep.subr.bf16.mxu0 0
      %835 = vmatpush1.bf16.xpose.msra.mxu0 %v814
      %836 = vmatprep.subr.bf16.mxu0 0
      %837 = vmatpush1.bf16.xpose.msra.mxu0 %v815
      %838 = vmatprep.subr.bf16.mxu0 0
      %839 = vmatpush1.bf16.xpose.msra.mxu0 %v816
      %840 = vmatprep.subr.bf16.mxu0 0
      %841 = vmatpush1.bf16.xpose.msra.mxu0 %v817
      %842 = vmatprep.subr.bf16.mxu0 0
      %843 = vmatpush1.bf16.xpose.msra.mxu0 0
      %844 = vmatprep.subr.bf16.mxu0 0
      %845 = vmatpush1.bf16.xpose.msra.mxu0 0
      %846 = vmatprep.subr.bf16.mxu0 0
      %847 = vmatpush1.bf16.xpose.msra.mxu0 0
      %848 = vmatprep.subr.bf16.mxu0 0
      %849 = vmatpush1.bf16.xpose.msra.mxu0 0
      %850 = vmatprep.subr.bf16.mxu0 0
      %851 = vmatpush1.bf16.xpose.msra.mxu0 0
      %852 = vmatprep.subr.bf16.mxu0 0
      %853 = vmatpush1.bf16.xpose.msra.mxu0 0
      %854 = vmatprep.subr.bf16.mxu0 0
      %855 = vmatpush1.bf16.xpose.msra.mxu0 0
      %856 = vmatprep.subr.bf16.mxu0 0
      %857 = vmatpush1.bf16.xpose.msra.mxu0 0
      %858 = vmatprep.mubr.bf16.mxu0 0
      %859 = vmatmul.mubr.bf16.gmra.mrb[0].mxu0 %v739
      %v860 = vpop.f32.mrb[0].mxu0
      %v861 = vadd.f32 %v776, %v860
      %v862 = vpop.f32.mrb[0].mxu0
      %v863 = vpop.f32.mrb[0].mxu0
      %v864 = vadd.f32 %v776, %v863
      %v865 = vpop.f32.mrb[0].mxu0
      %866 = vmatprep.mubr.bf16.mxu0 0
      %867 = vmatmul.mubr.bf16.gmra.mrb[0].mxu0 %v740
      %v868 = vpop.f32.mrb[0].mxu0
      %v869 = vadd.f32 %v776, %v868
      %v870 = vpop.f32.mrb[0].mxu0
      %v871 = vpop.f32.mrb[0].mxu0
      %v872 = vadd.f32 %v776, %v871
      %v873 = vpop.f32.mrb[0].mxu0
      %874 = vmatprep.mubr.bf16.mxu0 0
      %875 = vmatmul.mubr.bf16.gmra.mrb[0].mxu0 %v741
      %v876 = vpop.f32.mrb[0].mxu0
      %v877 = vadd.f32 %v776, %v876
      %v878 = vpop.f32.mrb[0].mxu0
      %v879 = vpop.f32.mrb[0].mxu0
      %v880 = vadd.f32 %v776, %v879
      %v881 = vpop.f32.mrb[0].mxu0
      %882 = vmatprep.mubr.bf16.mxu0 0
      %883 = vmatmul.mubr.bf16.gmra.mrb[0].mxu0 %v742
      %v884 = vpop.f32.mrb[0].mxu0
      %v885 = vadd.f32 %v776, %v884
      %v886 = vpop.f32.mrb[0].mxu0
      %v887 = vpop.f32.mrb[0].mxu0
      %v888 = vadd.f32 %v776, %v887
      %v889 = vpop.f32.mrb[0].mxu0
      %890 = vmatprep.mubr.bf16.mxu0 0
      %891 = vmatmul.mubr.bf16.gmra.mrb[0].mxu0 %v743
      %v892 = vpop.f32.mrb[0].mxu0
      %v893 = vadd.f32 %v776, %v892
      %v894 = vpop.f32.mrb[0].mxu0
      %v895 = vpop.f32.mrb[0].mxu0
      %v896 = vadd.f32 %v776, %v895
      %v897 = vpop.f32.mrb[0].mxu0
      %898 = vmatprep.mubr.bf16.mxu0 0
      %899 = vmatmul.mubr.bf16.gmra.mrb[0].mxu0 %v744
      %v900 = vpop.f32.mrb[0].mxu0
      %v901 = vadd.f32 %v776, %v900
      %v902 = vpop.f32.mrb[0].mxu0
      %v903 = vpop.f32.mrb[0].mxu0
      %v904 = vadd.f32 %v776, %v903
      %v905 = vpop.f32.mrb[0].mxu0
      %906 = vmatprep.mubr.bf16.mxu0 0
      %907 = vmatmul.mubr.bf16.gmra.mrb[0].mxu0 %v745
      %v908 = vpop.f32.mrb[0].mxu0
      %v909 = vadd.f32 %v776, %v908
      %v910 = vpop.f32.mrb[0].mxu0
      %v911 = vpop.f32.mrb[0].mxu0
      %v912 = vadd.f32 %v776, %v911
      %v913 = vpop.f32.mrb[0].mxu0
      %914 = vmatprep.mubr.bf16.mxu0 0
      %915 = vmatmul.mubr.bf16.gmra.mrb[0].mxu0 %v746
      %v916 = vpop.f32.mrb[0].mxu0
      %v917 = vadd.f32 %v776, %v916
      %v918 = vpop.f32.mrb[0].mxu0
      %v919 = vpop.f32.mrb[0].mxu0
      %v920 = vadd.f32 %v776, %v919
      %v921 = vpop.f32.mrb[0].mxu0
      %922 = vmatprep.mubr.bf16.mxu0 0
      %923 = vmatmul.mubr.bf16.gmra.mrb[0].mxu0 %v747
      %v924 = vpop.f32.mrb[0].mxu0
      %v925 = vadd.f32 %v776, %v924
      %v926 = vpop.f32.mrb[0].mxu0
      %v927 = vpop.f32.mrb[0].mxu0
      %v928 = vadd.f32 %v776, %v927
      %v929 = vpop.f32.mrb[0].mxu0
      %930 = vmatprep.mubr.bf16.mxu0 0
      %931 = vmatmul.mubr.bf16.gmra.mrb[0].mxu0 %v748
      %v932 = vpop.f32.mrb[0].mxu0
      %v933 = vadd.f32 %v776, %v932
      %v934 = vpop.f32.mrb[0].mxu0
      %v935 = vpop.f32.mrb[0].mxu0
      %v936 = vadd.f32 %v776, %v935
      %v937 = vpop.f32.mrb[0].mxu0
      %938 = vmatprep.mubr.bf16.mxu0 0
      %939 = vmatmul.mubr.bf16.gmra.mrb[0].mxu0 %v749
      %v940 = vpop.f32.mrb[0].mxu0
      %v941 = vadd.f32 %v776, %v940
      %v942 = vpop.f32.mrb[0].mxu0
      %v943 = vpop.f32.mrb[0].mxu0
      %v944 = vadd.f32 %v776, %v943
      %v945 = vpop.f32.mrb[0].mxu0
      %946 = vmatprep.mubr.bf16.mxu0 0
      %947 = vmatmul.mubr.bf16.gmra.mrb[0].mxu0 %v750
      %v948 = vpop.f32.mrb[0].mxu0
      %v949 = vadd.f32 %v776, %v948
      %v950 = vpop.f32.mrb[0].mxu0
      %v951 = vpop.f32.mrb[0].mxu0
      %v952 = vadd.f32 %v776, %v951
      %v953 = vpop.f32.mrb[0].mxu0
      %954 = vmatprep.mubr.bf16.mxu0 0
      %955 = vmatmul.mubr.bf16.gmra.mrb[0].mxu0 %v751
      %v956 = vpop.f32.mrb[0].mxu0
      %v957 = vadd.f32 %v776, %v956
      %v958 = vpop.f32.mrb[0].mxu0
      %v959 = vpop.f32.mrb[0].mxu0
      %v960 = vadd.f32 %v776, %v959
      %v961 = vpop.f32.mrb[0].mxu0
      %962 = vmatprep.mubr.bf16.mxu0 0
      %963 = vmatmul.mubr.bf16.gmra.mrb[0].mxu0 %v752
      %v964 = vpop.f32.mrb[0].mxu0
      %v965 = vadd.f32 %v776, %v964
      %v966 = vpop.f32.mrb[0].mxu0
      %v967 = vpop.f32.mrb[0].mxu0
      %v968 = vadd.f32 %v776, %v967
      %v969 = vpop.f32.mrb[0].mxu0
      %970 = vmatprep.mubr.bf16.mxu0 0
      %971 = vmatmul.mubr.bf16.gmra.mrb[0].mxu0 %v753
      %v972 = vpop.f32.mrb[0].mxu0
      %v973 = vadd.f32 %v776, %v972
      %v974 = vpop.f32.mrb[0].mxu0
      %v975 = vpop.f32.mrb[0].mxu0
      %v976 = vadd.f32 %v776, %v975
      %v977 = vpop.f32.mrb[0].mxu0
      %978 = vmatprep.mubr.bf16.mxu0 0
      %979 = vmatmul.mubr.bf16.gmra.mrb[0].mxu0 %v754
      %v980 = vpop.f32.mrb[0].mxu0
      %v981 = vadd.f32 %v776, %v980
      %v982 = vpop.f32.mrb[0].mxu0
      %v983 = vpop.f32.mrb[0].mxu0
      %v984 = vadd.f32 %v776, %v983
      %v985 = vpop.f32.mrb[0].mxu0
      %986 = vdwg.mxu0
      %v987 = vmax.f32 %v861, 0.0
      %v988 = vmax.f32 %v864, 0.0
      %v989 = vmax.f32 %v869, 0.0
      %v990 = vmax.f32 %v872, 0.0
      %v991 = vmax.f32 %v877, 0.0
      %v992 = vmax.f32 %v880, 0.0
      %v993 = vmax.f32 %v885, 0.0
      %v994 = vmax.f32 %v888, 0.0
      %v995 = vmax.f32 %v893, 0.0
      %v996 = vmax.f32 %v896, 0.0
      %v997 = vmax.f32 %v901, 0.0
      %v998 = vmax.f32 %v904, 0.0
      %v999 = vmax.f32 %v909, 0.0
      %v1000 = vmax.f32 %v912, 0.0
      %v1001 = vmax.f32 %v917, 0.0
      %v1002 = vmax.f32 %v920, 0.0
      %v1003 = vmax.f32 %v925, 0.0
      %v1004 = vmax.f32 %v928, 0.0
      %v1005 = vmax.f32 %v933, 0.0
      %v1006 = vmax.f32 %v936, 0.0
      %v1007 = vmax.f32 %v941, 0.0
      %v1008 = vmax.f32 %v944, 0.0
      %v1009 = vmax.f32 %v949, 0.0
      %v1010 = vmax.f32 %v952, 0.0
      %v1011 = vmax.f32 %v957, 0.0
      %v1012 = vmax.f32 %v960, 0.0
      %v1013 = vmax.f32 %v965, 0.0
      %v1014 = vmax.f32 %v968, 0.0
      %v1015 = vmax.f32 %v973, 0.0
      %v1016 = vmax.f32 %v976, 0.0
      %v1017 = vmax.f32 %v981, 0.0
      %v1018 = vmax.f32 %v984, 0.0
      %v1019 = vadd.f32 %v987, %v707
      %v1020 = vadd.f32 %v988, %v708
      %v1021 = vadd.f32 %v989, %v709
      %v1022 = vadd.f32 %v990, %v710
      %v1023 = vadd.f32 %v991, %v711
      %v1024 = vadd.f32 %v992, %v712
      %v1025 = vadd.f32 %v993, %v713
      %v1026 = vadd.f32 %v994, %v714
      %v1027 = vadd.f32 %v995, %v715
      %v1028 = vadd.f32 %v996, %v716
      %v1029 = vadd.f32 %v997, %v717
      %v1030 = vadd.f32 %v998, %v718
      %v1031 = vadd.f32 %v999, %v719
      %v1032 = vadd.f32 %v1000, %v720
      %v1033 = vadd.f32 %v1001, %v721
      %v1034 = vadd.f32 %v1002, %v722
      %v1035 = vadd.f32 %v1003, %v723
      %v1036 = vadd.f32 %v1004, %v724
      %v1037 = vadd.f32 %v1005, %v725
      %v1038 = vadd.f32 %v1006, %v726
      %v1039 = vadd.f32 %v1007, %v727
      %v1040 = vadd.f32 %v1008, %v728
      %v1041 = vadd.f32 %v1009, %v729
      %v1042 = vadd.f32 %v1010, %v730
      %v1043 = vadd.f32 %v1011, %v731
      %v1044 = vadd.f32 %v1012, %v732
      %v1045 = vadd.f32 %v1013, %v733
      %v1046 = vadd.f32 %v1014, %v734
      %v1047 = vadd.f32 %v1015, %v735
      %v1048 = vadd.f32 %v1016, %v736
      %v1049 = vadd.f32 %v1017, %v737
      %v1050 = vadd.f32 %v1018, %v738
      %v1051 = vmul.f32 %v1019, %v1019
      %v1052 = vmul.f32 %v1020, %v1020
      %v1053 = vmul.f32 %v1021, %v1021
      %v1054 = vmul.f32 %v1022, %v1022
      %v1055 = vmul.f32 %v1023, %v1023
      %v1056 = vmul.f32 %v1024, %v1024
      %v1057 = vmul.f32 %v1025, %v1025
      %v1058 = vmul.f32 %v1026, %v1026
      %v1059 = vmul.f32 %v1027, %v1027
      %v1060 = vmul.f32 %v1028, %v1028
      %v1061 = vmul.f32 %v1029, %v1029
      %v1062 = vmul.f32 %v1030, %v1030
      %v1063 = vmul.f32 %v1031, %v1031
      %v1064 = vmul.f32 %v1032, %v1032
      %v1065 = vmul.f32 %v1033, %v1033
      %v1066 = vmul.f32 %v1034, %v1034
      %v1067 = vmul.f32 %v1035, %v1035
      %v1068 = vmul.f32 %v1036, %v1036
      %v1069 = vmul.f32 %v1037, %v1037
      %v1070 = vmul.f32 %v1038, %v1038
      %v1071 = vmul.f32 %v1039, %v1039
      %v1072 = vmul.f32 %v1040, %v1040
      %v1073 = vmul.f32 %v1041, %v1041
      %v1074 = vmul.f32 %v1042, %v1042
      %v1075 = vmul.f32 %v1043, %v1043
      %v1076 = vmul.f32 %v1044, %v1044
      %v1077 = vmul.f32 %v1045, %v1045
      %v1078 = vmul.f32 %v1046, %v1046
      %v1079 = vmul.f32 %v1047, %v1047
      %v1080 = vmul.f32 %v1048, %v1048
      %v1081 = vmul.f32 %v1049, %v1049
      %v1082 = vmul.f32 %v1050, %v1050
      %1083 = vadd.xlane.f32.xlu0 %v1051
      %v1084 = vpop.xlane.xlu0 %1083
      %1085 = vadd.xlane.f32.xlu0 %v1052
      %v1086 = vpop.xlane.xlu0 %1085
      %1087 = vadd.xlane.f32.xlu0 %v1053
      %v1088 = vpop.xlane.xlu0 %1087
      %1089 = vadd.xlane.f32.xlu0 %v1054
      %v1090 = vpop.xlane.xlu0 %1089
      %1091 = vadd.xlane.f32.xlu0 %v1055
      %v1092 = vpop.xlane.xlu0 %1091
      %1093 = vadd.xlane.f32.xlu0 %v1056
      %v1094 = vpop.xlane.xlu0 %1093
      %1095 = vadd.xlane.f32.xlu0 %v1057
      %v1096 = vpop.xlane.xlu0 %1095
      %1097 = vadd.xlane.f32.xlu0 %v1058
      %v1098 = vpop.xlane.xlu0 %1097
      %1099 = vadd.xlane.f32.xlu0 %v1059
      %v1100 = vpop.xlane.xlu0 %1099
      %1101 = vadd.xlane.f32.xlu0 %v1060
      %v1102 = vpop.xlane.xlu0 %1101
      %1103 = vadd.xlane.f32.xlu0 %v1061
      %v1104 = vpop.xlane.xlu0 %1103
      %1105 = vadd.xlane.f32.xlu0 %v1062
      %v1106 = vpop.xlane.xlu0 %1105
      %1107 = vadd.xlane.f32.xlu0 %v1063
      %v1108 = vpop.xlane.xlu0 %1107
      %1109 = vadd.xlane.f32.xlu0 %v1064
      %v1110 = vpop.xlane.xlu0 %1109
      %1111 = vadd.xlane.f32.xlu0 %v1065
      %v1112 = vpop.xlane.xlu0 %1111
      %1113 = vadd.xlane.f32.xlu0 %v1066
      %v1114 = vpop.xlane.xlu0 %1113
      %1115 = vadd.xlane.f32.xlu0 %v1067
      %v1116 = vpop.xlane.xlu0 %1115
      %1117 = vadd.xlane.f32.xlu0 %v1068
      %v1118 = vpop.xlane.xlu0 %1117
      %1119 = vadd.xlane.f32.xlu0 %v1069
      %v1120 = vpop.xlane.xlu0 %1119
      %1121 = vadd.xlane.f32.xlu0 %v1070
      %v1122 = vpop.xlane.xlu0 %1121
      %1123 = vadd.xlane.f32.xlu0 %v1071
      %v1124 = vpop.xlane.xlu0 %1123
      %1125 = vadd.xlane.f32.xlu0 %v1072
      %v1126 = vpop.xlane.xlu0 %1125
      %1127 = vadd.xlane.f32.xlu0 %v1073
      %v1128 = vpop.xlane.xlu0 %1127
      %1129 = vadd.xlane.f32.xlu0 %v1074
      %v1130 = vpop.xlane.xlu0 %1129
      %1131 = vadd.xlane.f32.xlu0 %v1075
      %v1132 = vpop.xlane.xlu0 %1131
      %1133 = vadd.xlane.f32.xlu0 %v1076
      %v1134 = vpop.xlane.xlu0 %1133
      %1135 = vadd.xlane.f32.xlu0 %v1077
      %v1136 = vpop.xlane.xlu0 %1135
      %1137 = vadd.xlane.f32.xlu0 %v1078
      %v1138 = vpop.xlane.xlu0 %1137
      %1139 = vadd.xlane.f32.xlu0 %v1079
      %v1140 = vpop.xlane.xlu0 %1139
      %1141 = vadd.xlane.f32.xlu0 %v1080
      %v1142 = vpop.xlane.xlu0 %1141
      %1143 = vadd.xlane.f32.xlu0 %v1081
      %v1144 = vpop.xlane.xlu0 %1143
      %1145 = vadd.xlane.f32.xlu0 %v1082
      %v1146 = vpop.xlane.xlu0 %1145
      %v1147 = vrsqrt.pop %v1084
      %v1148 = vmul.f32 %v1084, %v1147
      %vm1149 = vcmp.eq.f32.partialorder %v1084, inf
      %v1150 = vsel %vm1149, %v1084, %v1148
      %vm1151 = vcmp.eq.f32.partialorder %v1084, 0.0
      %v1152 = vand.u32 %v1084, 2147483648
      %v1153 = vsel %vm1151, %v1152, %v1150
      %v1154 = vrsqrt.pop %v1086
      %v1155 = vmul.f32 %v1086, %v1154
      %vm1156 = vcmp.eq.f32.partialorder %v1086, inf
      %v1157 = vsel %vm1156, %v1086, %v1155
      %vm1158 = vcmp.eq.f32.partialorder %v1086, 0.0
      %v1159 = vand.u32 %v1086, 2147483648
      %v1160 = vsel %vm1158, %v1159, %v1157
      %v1161 = vrsqrt.pop %v1088
      %v1162 = vmul.f32 %v1088, %v1161
      %vm1163 = vcmp.eq.f32.partialorder %v1088, inf
      %v1164 = vsel %vm1163, %v1088, %v1162
      %vm1165 = vcmp.eq.f32.partialorder %v1088, 0.0
      %v1166 = vand.u32 %v1088, 2147483648
      %v1167 = vsel %vm1165, %v1166, %v1164
      %v1168 = vrsqrt.pop %v1090
      %v1169 = vmul.f32 %v1090, %v1168
      %vm1170 = vcmp.eq.f32.partialorder %v1090, inf
      %v1171 = vsel %vm1170, %v1090, %v1169
      %vm1172 = vcmp.eq.f32.partialorder %v1090, 0.0
      %v1173 = vand.u32 %v1090, 2147483648
      %v1174 = vsel %vm1172, %v1173, %v1171
      %v1175 = vrsqrt.pop %v1092
      %v1176 = vmul.f32 %v1092, %v1175
      %vm1177 = vcmp.eq.f32.partialorder %v1092, inf
      %v1178 = vsel %vm1177, %v1092, %v1176
      %vm1179 = vcmp.eq.f32.partialorder %v1092, 0.0
      %v1180 = vand.u32 %v1092, 2147483648
      %v1181 = vsel %vm1179, %v1180, %v1178
      %v1182 = vrsqrt.pop %v1094
      %v1183 = vmul.f32 %v1094, %v1182
      %vm1184 = vcmp.eq.f32.partialorder %v1094, inf
      %v1185 = vsel %vm1184, %v1094, %v1183
      %vm1186 = vcmp.eq.f32.partialorder %v1094, 0.0
      %v1187 = vand.u32 %v1094, 2147483648
      %v1188 = vsel %vm1186, %v1187, %v1185
      %v1189 = vrsqrt.pop %v1096
      %v1190 = vmul.f32 %v1096, %v1189
      %vm1191 = vcmp.eq.f32.partialorder %v1096, inf
      %v1192 = vsel %vm1191, %v1096, %v1190
      %vm1193 = vcmp.eq.f32.partialorder %v1096, 0.0
      %v1194 = vand.u32 %v1096, 2147483648
      %v1195 = vsel %vm1193, %v1194, %v1192
      %v1196 = vrsqrt.pop %v1098
      %v1197 = vmul.f32 %v1098, %v1196
      %vm1198 = vcmp.eq.f32.partialorder %v1098, inf
      %v1199 = vsel %vm1198, %v1098, %v1197
      %vm1200 = vcmp.eq.f32.partialorder %v1098, 0.0
      %v1201 = vand.u32 %v1098, 2147483648
      %v1202 = vsel %vm1200, %v1201, %v1199
      %v1203 = vrsqrt.pop %v1100
      %v1204 = vmul.f32 %v1100, %v1203
      %vm1205 = vcmp.eq.f32.partialorder %v1100, inf
      %v1206 = vsel %vm1205, %v1100, %v1204
      %vm1207 = vcmp.eq.f32.partialorder %v1100, 0.0
      %v1208 = vand.u32 %v1100, 2147483648
      %v1209 = vsel %vm1207, %v1208, %v1206
      %v1210 = vrsqrt.pop %v1102
      %v1211 = vmul.f32 %v1102, %v1210
      %vm1212 = vcmp.eq.f32.partialorder %v1102, inf
      %v1213 = vsel %vm1212, %v1102, %v1211
      %vm1214 = vcmp.eq.f32.partialorder %v1102, 0.0
      %v1215 = vand.u32 %v1102, 2147483648
      %v1216 = vsel %vm1214, %v1215, %v1213
      %v1217 = vrsqrt.pop %v1104
      %v1218 = vmul.f32 %v1104, %v1217
      %vm1219 = vcmp.eq.f32.partialorder %v1104, inf
      %v1220 = vsel %vm1219, %v1104, %v1218
      %vm1221 = vcmp.eq.f32.partialorder %v1104, 0.0
      %v1222 = vand.u32 %v1104, 2147483648
      %v1223 = vsel %vm1221, %v1222, %v1220
      %v1224 = vrsqrt.pop %v1106
      %v1225 = vmul.f32 %v1106, %v1224
      %vm1226 = vcmp.eq.f32.partialorder %v1106, inf
      %v1227 = vsel %vm1226, %v1106, %v1225
      %vm1228 = vcmp.eq.f32.partialorder %v1106, 0.0
      %v1229 = vand.u32 %v1106, 2147483648
      %v1230 = vsel %vm1228, %v1229, %v1227
      %v1231 = vrsqrt.pop %v1108
      %v1232 = vmul.f32 %v1108, %v1231
      %vm1233 = vcmp.eq.f32.partialorder %v1108, inf
      %v1234 = vsel %vm1233, %v1108, %v1232
      %vm1235 = vcmp.eq.f32.partialorder %v1108, 0.0
      %v1236 = vand.u32 %v1108, 2147483648
      %v1237 = vsel %vm1235, %v1236, %v1234
      %v1238 = vrsqrt.pop %v1110
      %v1239 = vmul.f32 %v1110, %v1238
      %vm1240 = vcmp.eq.f32.partialorder %v1110, inf
      %v1241 = vsel %vm1240, %v1110, %v1239
      %vm1242 = vcmp.eq.f32.partialorder %v1110, 0.0
      %v1243 = vand.u32 %v1110, 2147483648
      %v1244 = vsel %vm1242, %v1243, %v1241
      %v1245 = vrsqrt.pop %v1112
      %v1246 = vmul.f32 %v1112, %v1245
      %vm1247 = vcmp.eq.f32.partialorder %v1112, inf
      %v1248 = vsel %vm1247, %v1112, %v1246
      %vm1249 = vcmp.eq.f32.partialorder %v1112, 0.0
      %v1250 = vand.u32 %v1112, 2147483648
      %v1251 = vsel %vm1249, %v1250, %v1248
      %v1252 = vrsqrt.pop %v1114
      %v1253 = vmul.f32 %v1114, %v1252
      %vm1254 = vcmp.eq.f32.partialorder %v1114, inf
      %v1255 = vsel %vm1254, %v1114, %v1253
      %vm1256 = vcmp.eq.f32.partialorder %v1114, 0.0
      %v1257 = vand.u32 %v1114, 2147483648
      %v1258 = vsel %vm1256, %v1257, %v1255
      %v1259 = vrsqrt.pop %v1116
      %v1260 = vmul.f32 %v1116, %v1259
      %vm1261 = vcmp.eq.f32.partialorder %v1116, inf
      %v1262 = vsel %vm1261, %v1116, %v1260
      %vm1263 = vcmp.eq.f32.partialorder %v1116, 0.0
      %v1264 = vand.u32 %v1116, 2147483648
      %v1265 = vsel %vm1263, %v1264, %v1262
      %v1266 = vrsqrt.pop %v1118
      %v1267 = vmul.f32 %v1118, %v1266
      %vm1268 = vcmp.eq.f32.partialorder %v1118, inf
      %v1269 = vsel %vm1268, %v1118, %v1267
      %vm1270 = vcmp.eq.f32.partialorder %v1118, 0.0
      %v1271 = vand.u32 %v1118, 2147483648
      %v1272 = vsel %vm1270, %v1271, %v1269
      %v1273 = vrsqrt.pop %v1120
      %v1274 = vmul.f32 %v1120, %v1273
      %vm1275 = vcmp.eq.f32.partialorder %v1120, inf
      %v1276 = vsel %vm1275, %v1120, %v1274
      %vm1277 = vcmp.eq.f32.partialorder %v1120, 0.0
      %v1278 = vand.u32 %v1120, 2147483648
      %v1279 = vsel %vm1277, %v1278, %v1276
      %v1280 = vrsqrt.pop %v1122
      %v1281 = vmul.f32 %v1122, %v1280
      %vm1282 = vcmp.eq.f32.partialorder %v1122, inf
      %v1283 = vsel %vm1282, %v1122, %v1281
      %vm1284 = vcmp.eq.f32.partialorder %v1122, 0.0
      %v1285 = vand.u32 %v1122, 2147483648
      %v1286 = vsel %vm1284, %v1285, %v1283
      %v1287 = vrsqrt.pop %v1124
      %v1288 = vmul.f32 %v1124, %v1287
      %vm1289 = vcmp.eq.f32.partialorder %v1124, inf
      %v1290 = vsel %vm1289, %v1124, %v1288
      %vm1291 = vcmp.eq.f32.partialorder %v1124, 0.0
      %v1292 = vand.u32 %v1124, 2147483648
      %v1293 = vsel %vm1291, %v1292, %v1290
      %v1294 = vrsqrt.pop %v1126
      %v1295 = vmul.f32 %v1126, %v1294
      %vm1296 = vcmp.eq.f32.partialorder %v1126, inf
      %v1297 = vsel %vm1296, %v1126, %v1295
      %vm1298 = vcmp.eq.f32.partialorder %v1126, 0.0
      %v1299 = vand.u32 %v1126, 2147483648
      %v1300 = vsel %vm1298, %v1299, %v1297
      %v1301 = vrsqrt.pop %v1128
      %v1302 = vmul.f32 %v1128, %v1301
      %vm1303 = vcmp.eq.f32.partialorder %v1128, inf
      %v1304 = vsel %vm1303, %v1128, %v1302
      %vm1305 = vcmp.eq.f32.partialorder %v1128, 0.0
      %v1306 = vand.u32 %v1128, 2147483648
      %v1307 = vsel %vm1305, %v1306, %v1304
      %v1308 = vrsqrt.pop %v1130
      %v1309 = vmul.f32 %v1130, %v1308
      %vm1310 = vcmp.eq.f32.partialorder %v1130, inf
      %v1311 = vsel %vm1310, %v1130, %v1309
      %vm1312 = vcmp.eq.f32.partialorder %v1130, 0.0
      %v1313 = vand.u32 %v1130, 2147483648
      %v1314 = vsel %vm1312, %v1313, %v1311
      %v1315 = vrsqrt.pop %v1132
      %v1316 = vmul.f32 %v1132, %v1315
      %vm1317 = vcmp.eq.f32.partialorder %v1132, inf
      %v1318 = vsel %vm1317, %v1132, %v1316
      %vm1319 = vcmp.eq.f32.partialorder %v1132, 0.0
      %v1320 = vand.u32 %v1132, 2147483648
      %v1321 = vsel %vm1319, %v1320, %v1318
      %v1322 = vrsqrt.pop %v1134
      %v1323 = vmul.f32 %v1134, %v1322
      %vm1324 = vcmp.eq.f32.partialorder %v1134, inf
      %v1325 = vsel %vm1324, %v1134, %v1323
      %vm1326 = vcmp.eq.f32.partialorder %v1134, 0.0
      %v1327 = vand.u32 %v1134, 2147483648
      %v1328 = vsel %vm1326, %v1327, %v1325
      %v1329 = vrsqrt.pop %v1136
      %v1330 = vmul.f32 %v1136, %v1329
      %vm1331 = vcmp.eq.f32.partialorder %v1136, inf
      %v1332 = vsel %vm1331, %v1136, %v1330
      %vm1333 = vcmp.eq.f32.partialorder %v1136, 0.0
      %v1334 = vand.u32 %v1136, 2147483648
      %v1335 = vsel %vm1333, %v1334, %v1332
      %v1336 = vrsqrt.pop %v1138
      %v1337 = vmul.f32 %v1138, %v1336
      %vm1338 = vcmp.eq.f32.partialorder %v1138, inf
      %v1339 = vsel %vm1338, %v1138, %v1337
      %vm1340 = vcmp.eq.f32.partialorder %v1138, 0.0
      %v1341 = vand.u32 %v1138, 2147483648
      %v1342 = vsel %vm1340, %v1341, %v1339
      %v1343 = vrsqrt.pop %v1140
      %v1344 = vmul.f32 %v1140, %v1343
      %vm1345 = vcmp.eq.f32.partialorder %v1140, inf
      %v1346 = vsel %vm1345, %v1140, %v1344
      %vm1347 = vcmp.eq.f32.partialorder %v1140, 0.0
      %v1348 = vand.u32 %v1140, 2147483648
      %v1349 = vsel %vm1347, %v1348, %v1346
      %v1350 = vrsqrt.pop %v1142
      %v1351 = vmul.f32 %v1142, %v1350
      %vm1352 = vcmp.eq.f32.partialorder %v1142, inf
      %v1353 = vsel %vm1352, %v1142, %v1351
      %vm1354 = vcmp.eq.f32.partialorder %v1142, 0.0
      %v1355 = vand.u32 %v1142, 2147483648
      %v1356 = vsel %vm1354, %v1355, %v1353
      %v1357 = vrsqrt.pop %v1144
      %v1358 = vmul.f32 %v1144, %v1357
      %vm1359 = vcmp.eq.f32.partialorder %v1144, inf
      %v1360 = vsel %vm1359, %v1144, %v1358
      %vm1361 = vcmp.eq.f32.partialorder %v1144, 0.0
      %v1362 = vand.u32 %v1144, 2147483648
      %v1363 = vsel %vm1361, %v1362, %v1360
      %v1364 = vrsqrt.pop %v1146
      %v1365 = vmul.f32 %v1146, %v1364
      %vm1366 = vcmp.eq.f32.partialorder %v1146, inf
      %v1367 = vsel %vm1366, %v1146, %v1365
      %vm1368 = vcmp.eq.f32.partialorder %v1146, 0.0
      %v1369 = vand.u32 %v1146, 2147483648
      %v1370 = vsel %vm1368, %v1369, %v1367
      %v1371 = vmax.f32 %v1153, 1e-12
      %v1372 = vmax.f32 %v1160, 1e-12
      %v1373 = vmax.f32 %v1167, 1e-12
      %v1374 = vmax.f32 %v1174, 1e-12
      %v1375 = vmax.f32 %v1181, 1e-12
      %v1376 = vmax.f32 %v1188, 1e-12
      %v1377 = vmax.f32 %v1195, 1e-12
      %v1378 = vmax.f32 %v1202, 1e-12
      %v1379 = vmax.f32 %v1209, 1e-12
      %v1380 = vmax.f32 %v1216, 1e-12
      %v1381 = vmax.f32 %v1223, 1e-12
      %v1382 = vmax.f32 %v1230, 1e-12
      %v1383 = vmax.f32 %v1237, 1e-12
      %v1384 = vmax.f32 %v1244, 1e-12
      %v1385 = vmax.f32 %v1251, 1e-12
      %v1386 = vmax.f32 %v1258, 1e-12
      %v1387 = vmax.f32 %v1265, 1e-12
      %v1388 = vmax.f32 %v1272, 1e-12
      %v1389 = vmax.f32 %v1279, 1e-12
      %v1390 = vmax.f32 %v1286, 1e-12
      %v1391 = vmax.f32 %v1293, 1e-12
      %v1392 = vmax.f32 %v1300, 1e-12
      %v1393 = vmax.f32 %v1307, 1e-12
      %v1394 = vmax.f32 %v1314, 1e-12
      %v1395 = vmax.f32 %v1321, 1e-12
      %v1396 = vmax.f32 %v1328, 1e-12
      %v1397 = vmax.f32 %v1335, 1e-12
      %v1398 = vmax.f32 %v1342, 1e-12
      %v1399 = vmax.f32 %v1349, 1e-12
      %v1400 = vmax.f32 %v1356, 1e-12
      %v1401 = vmax.f32 %v1363, 1e-12
      %v1402 = vmax.f32 %v1370, 1e-12
      %v1403 = vrcp.pop %v1371
      %v1404 = vmul.f32 %v1019, %v1403
      %v1405 = vrcp.pop %v1372
      %v1406 = vmul.f32 %v1020, %v1405
      %v1407 = vrcp.pop %v1373
      %v1408 = vmul.f32 %v1021, %v1407
      %v1409 = vrcp.pop %v1374
      %v1410 = vmul.f32 %v1022, %v1409
      %v1411 = vrcp.pop %v1375
      %v1412 = vmul.f32 %v1023, %v1411
      %v1413 = vrcp.pop %v1376
      %v1414 = vmul.f32 %v1024, %v1413
      %v1415 = vrcp.pop %v1377
      %v1416 = vmul.f32 %v1025, %v1415
      %v1417 = vrcp.pop %v1378
      %v1418 = vmul.f32 %v1026, %v1417
      %v1419 = vrcp.pop %v1379
      %v1420 = vmul.f32 %v1027, %v1419
      %v1421 = vrcp.pop %v1380
      %v1422 = vmul.f32 %v1028, %v1421
      %v1423 = vrcp.pop %v1381
      %v1424 = vmul.f32 %v1029, %v1423
      %v1425 = vrcp.pop %v1382
      %v1426 = vmul.f32 %v1030, %v1425
      %v1427 = vrcp.pop %v1383
      %v1428 = vmul.f32 %v1031, %v1427
      %v1429 = vrcp.pop %v1384
      %v1430 = vmul.f32 %v1032, %v1429
      %v1431 = vrcp.pop %v1385
      %v1432 = vmul.f32 %v1033, %v1431
      %v1433 = vrcp.pop %v1386
      %v1434 = vmul.f32 %v1034, %v1433
      %v1435 = vrcp.pop %v1387
      %v1436 = vmul.f32 %v1035, %v1435
      %v1437 = vrcp.pop %v1388
      %v1438 = vmul.f32 %v1036, %v1437
      %v1439 = vrcp.pop %v1389
      %v1440 = vmul.f32 %v1037, %v1439
      %v1441 = vrcp.pop %v1390
      %v1442 = vmul.f32 %v1038, %v1441
      %v1443 = vrcp.pop %v1391
      %v1444 = vmul.f32 %v1039, %v1443
      %v1445 = vrcp.pop %v1392
      %v1446 = vmul.f32 %v1040, %v1445
      %v1447 = vrcp.pop %v1393
      %v1448 = vmul.f32 %v1041, %v1447
      %v1449 = vrcp.pop %v1394
      %v1450 = vmul.f32 %v1042, %v1449
      %v1451 = vrcp.pop %v1395
      %v1452 = vmul.f32 %v1043, %v1451
      %v1453 = vrcp.pop %v1396
      %v1454 = vmul.f32 %v1044, %v1453
      %v1455 = vrcp.pop %v1397
      %v1456 = vmul.f32 %v1045, %v1455
      %v1457 = vrcp.pop %v1398
      %v1458 = vmul.f32 %v1046, %v1457
      %v1459 = vrcp.pop %v1399
      %v1460 = vmul.f32 %v1047, %v1459
      %v1461 = vrcp.pop %v1400
      %v1462 = vmul.f32 %v1048, %v1461
      %v1463 = vrcp.pop %v1401
      %v1464 = vmul.f32 %v1049, %v1463
      %v1465 = vrcp.pop %v1402
      %v1466 = vmul.f32 %v1050, %v1465
      %v1467 = vld [vmem:[#allocation11] sm:$0xff]
      %v1468 = vld [vmem:[#allocation11 + $0x8] sm:$0xff]
      %v1469 = vld [vmem:[#allocation11 + $0x10] sm:$0xff]
      %v1470 = vld [vmem:[#allocation11 + $0x18] sm:$0xff]
      %v1471 = vld [vmem:[#allocation11 + $0x20] sm:$0xff]
      %v1472 = vld [vmem:[#allocation11 + $0x28] sm:$0xff]
      %v1473 = vld [vmem:[#allocation11 + $0x30] sm:$0xff]
      %v1474 = vld [vmem:[#allocation11 + $0x38] sm:$0xff]
      %v1475 = vld [vmem:[#allocation11 + $0x40] sm:$0xff]
      %v1476 = vld [vmem:[#allocation11 + $0x48] sm:$0xff]
      %v1477 = vld [vmem:[#allocation11 + $0x50] sm:$0xff]
      %v1478 = vld [vmem:[#allocation11 + $0x58] sm:$0xff]
      %v1479 = vld [vmem:[#allocation11 + $0x60] sm:$0xff]
      %v1480 = vld [vmem:[#allocation11 + $0x68] sm:$0xff]
      %v1481 = vld [vmem:[#allocation11 + $0x70] sm:$0xff]
      %v1482 = vld [vmem:[#allocation11 + $0x78] sm:$0xff]
      %v1483 = vld [vmem:[#allocation11 + $0x80] sm:$0xff]
      %v1484 = vld [vmem:[#allocation11 + $0x88] sm:$0xff]
      %v1485 = vld [vmem:[#allocation11 + $0x90] sm:$0xff]
      %v1486 = vld [vmem:[#allocation11 + $0x98] sm:$0xff]
      %v1487 = vld [vmem:[#allocation11 + $0xa0] sm:$0xff]
      %v1488 = vld [vmem:[#allocation11 + $0xa8] sm:$0xff]
      %v1489 = vld [vmem:[#allocation11 + $0xb0] sm:$0xff]
      %v1490 = vld [vmem:[#allocation11 + $0xb8] sm:$0xff]
      %v1491 = vld [vmem:[#allocation11 + $0xc0] sm:$0xff]
      %v1492 = vld [vmem:[#allocation11 + $0xc8] sm:$0xff]
      %v1493 = vld [vmem:[#allocation11 + $0xd0] sm:$0xff]
      %v1494 = vld [vmem:[#allocation11 + $0xd8] sm:$0xff]
      %v1495 = vld [vmem:[#allocation11 + $0xe0] sm:$0xff]
      %v1496 = vld [vmem:[#allocation11 + $0xe8] sm:$0xff]
      %v1497 = vld [vmem:[#allocation11 + $0xf0] sm:$0xff]
      %v1498 = vld [vmem:[#allocation11 + $0xf8] sm:$0xff]
      %v1499 = vmul.f32 %v1467, %v1467
      %v1500 = vmul.f32 %v1468, %v1468
      %v1501 = vmul.f32 %v1469, %v1469
      %v1502 = vmul.f32 %v1470, %v1470
      %v1503 = vmul.f32 %v1471, %v1471
      %v1504 = vmul.f32 %v1472, %v1472
      %v1505 = vmul.f32 %v1473, %v1473
      %v1506 = vmul.f32 %v1474, %v1474
      %v1507 = vmul.f32 %v1475, %v1475
      %v1508 = vmul.f32 %v1476, %v1476
      %v1509 = vmul.f32 %v1477, %v1477
      %v1510 = vmul.f32 %v1478, %v1478
      %v1511 = vmul.f32 %v1479, %v1479
      %v1512 = vmul.f32 %v1480, %v1480
      %v1513 = vmul.f32 %v1481, %v1481
      %v1514 = vmul.f32 %v1482, %v1482
      %v1515 = vmul.f32 %v1483, %v1483
      %v1516 = vmul.f32 %v1484, %v1484
      %v1517 = vmul.f32 %v1485, %v1485
      %v1518 = vmul.f32 %v1486, %v1486
      %v1519 = vmul.f32 %v1487, %v1487
      %v1520 = vmul.f32 %v1488, %v1488
      %v1521 = vmul.f32 %v1489, %v1489
      %v1522 = vmul.f32 %v1490, %v1490
      %v1523 = vmul.f32 %v1491, %v1491
      %v1524 = vmul.f32 %v1492, %v1492
      %v1525 = vmul.f32 %v1493, %v1493
      %v1526 = vmul.f32 %v1494, %v1494
      %v1527 = vmul.f32 %v1495, %v1495
      %v1528 = vmul.f32 %v1496, %v1496
      %v1529 = vmul.f32 %v1497, %v1497
      %v1530 = vmul.f32 %v1498, %v1498
      %1531 = vadd.xlane.f32.xlu0 %v1499
      %v1532 = vpop.xlane.xlu0 %1531
      %1533 = vadd.xlane.f32.xlu0 %v1500
      %v1534 = vpop.xlane.xlu0 %1533
      %1535 = vadd.xlane.f32.xlu0 %v1501
      %v1536 = vpop.xlane.xlu0 %1535
      %1537 = vadd.xlane.f32.xlu0 %v1502
      %v1538 = vpop.xlane.xlu0 %1537
      %1539 = vadd.xlane.f32.xlu0 %v1503
      %v1540 = vpop.xlane.xlu0 %1539
      %1541 = vadd.xlane.f32.xlu0 %v1504
      %v1542 = vpop.xlane.xlu0 %1541
      %1543 = vadd.xlane.f32.xlu0 %v1505
      %v1544 = vpop.xlane.xlu0 %1543
      %1545 = vadd.xlane.f32.xlu0 %v1506
      %v1546 = vpop.xlane.xlu0 %1545
      %1547 = vadd.xlane.f32.xlu0 %v1507
      %v1548 = vpop.xlane.xlu0 %1547
      %1549 = vadd.xlane.f32.xlu0 %v1508
      %v1550 = vpop.xlane.xlu0 %1549
      %1551 = vadd.xlane.f32.xlu0 %v1509
      %v1552 = vpop.xlane.xlu0 %1551
      %1553 = vadd.xlane.f32.xlu0 %v1510
      %v1554 = vpop.xlane.xlu0 %1553
      %1555 = vadd.xlane.f32.xlu0 %v1511
      %v1556 = vpop.xlane.xlu0 %1555
      %1557 = vadd.xlane.f32.xlu0 %v1512
      %v1558 = vpop.xlane.xlu0 %1557
      %1559 = vadd.xlane.f32.xlu0 %v1513
      %v1560 = vpop.xlane.xlu0 %1559
      %1561 = vadd.xlane.f32.xlu0 %v1514
      %v1562 = vpop.xlane.xlu0 %1561
      %1563 = vadd.xlane.f32.xlu0 %v1515
      %v1564 = vpop.xlane.xlu0 %1563
      %1565 = vadd.xlane.f32.xlu0 %v1516
      %v1566 = vpop.xlane.xlu0 %1565
      %1567 = vadd.xlane.f32.xlu0 %v1517
      %v1568 = vpop.xlane.xlu0 %1567
      %1569 = vadd.xlane.f32.xlu0 %v1518
      %v1570 = vpop.xlane.xlu0 %1569
      %1571 = vadd.xlane.f32.xlu0 %v1519
      %v1572 = vpop.xlane.xlu0 %1571
      %1573 = vadd.xlane.f32.xlu0 %v1520
      %v1574 = vpop.xlane.xlu0 %1573
      %1575 = vadd.xlane.f32.xlu0 %v1521
      %v1576 = vpop.xlane.xlu0 %1575
      %1577 = vadd.xlane.f32.xlu0 %v1522
      %v1578 = vpop.xlane.xlu0 %1577
      %1579 = vadd.xlane.f32.xlu0 %v1523
      %v1580 = vpop.xlane.xlu0 %1579
      %1581 = vadd.xlane.f32.xlu0 %v1524
      %v1582 = vpop.xlane.xlu0 %1581
      %1583 = vadd.xlane.f32.xlu0 %v1525
      %v1584 = vpop.xlane.xlu0 %1583
      %1585 = vadd.xlane.f32.xlu0 %v1526
      %v1586 = vpop.xlane.xlu0 %1585
      %1587 = vadd.xlane.f32.xlu0 %v1527
      %v1588 = vpop.xlane.xlu0 %1587
      %1589 = vadd.xlane.f32.xlu0 %v1528
      %v1590 = vpop.xlane.xlu0 %1589
      %1591 = vadd.xlane.f32.xlu0 %v1529
      %v1592 = vpop.xlane.xlu0 %1591
      %1593 = vadd.xlane.f32.xlu0 %v1530
      %v1594 = vpop.xlane.xlu0 %1593
      %v1595 = vrsqrt.pop %v1532
      %v1596 = vmul.f32 %v1532, %v1595
      %vm1597 = vcmp.eq.f32.partialorder %v1532, inf
      %v1598 = vsel %vm1597, %v1532, %v1596
      %vm1599 = vcmp.eq.f32.partialorder %v1532, 0.0
      %v1600 = vand.u32 %v1532, 2147483648
      %v1601 = vsel %vm1599, %v1600, %v1598
      %v1602 = vrsqrt.pop %v1534
      %v1603 = vmul.f32 %v1534, %v1602
      %vm1604 = vcmp.eq.f32.partialorder %v1534, inf
      %v1605 = vsel %vm1604, %v1534, %v1603
      %vm1606 = vcmp.eq.f32.partialorder %v1534, 0.0
      %v1607 = vand.u32 %v1534, 2147483648
      %v1608 = vsel %vm1606, %v1607, %v1605
      %v1609 = vrsqrt.pop %v1536
      %v1610 = vmul.f32 %v1536, %v1609
      %vm1611 = vcmp.eq.f32.partialorder %v1536, inf
      %v1612 = vsel %vm1611, %v1536, %v1610
      %vm1613 = vcmp.eq.f32.partialorder %v1536, 0.0
      %v1614 = vand.u32 %v1536, 2147483648
      %v1615 = vsel %vm1613, %v1614, %v1612
      %v1616 = vrsqrt.pop %v1538
      %v1617 = vmul.f32 %v1538, %v1616
      %vm1618 = vcmp.eq.f32.partialorder %v1538, inf
      %v1619 = vsel %vm1618, %v1538, %v1617
      %vm1620 = vcmp.eq.f32.partialorder %v1538, 0.0
      %v1621 = vand.u32 %v1538, 2147483648
      %v1622 = vsel %vm1620, %v1621, %v1619
      %v1623 = vrsqrt.pop %v1540
      %v1624 = vmul.f32 %v1540, %v1623
      %vm1625 = vcmp.eq.f32.partialorder %v1540, inf
      %v1626 = vsel %vm1625, %v1540, %v1624
      %vm1627 = vcmp.eq.f32.partialorder %v1540, 0.0
      %v1628 = vand.u32 %v1540, 2147483648
      %v1629 = vsel %vm1627, %v1628, %v1626
      %v1630 = vrsqrt.pop %v1542
      %v1631 = vmul.f32 %v1542, %v1630
      %vm1632 = vcmp.eq.f32.partialorder %v1542, inf
      %v1633 = vsel %vm1632, %v1542, %v1631
      %vm1634 = vcmp.eq.f32.partialorder %v1542, 0.0
      %v1635 = vand.u32 %v1542, 2147483648
      %v1636 = vsel %vm1634, %v1635, %v1633
      %v1637 = vrsqrt.pop %v1544
      %v1638 = vmul.f32 %v1544, %v1637
      %vm1639 = vcmp.eq.f32.partialorder %v1544, inf
      %v1640 = vsel %vm1639, %v1544, %v1638
      %vm1641 = vcmp.eq.f32.partialorder %v1544, 0.0
      %v1642 = vand.u32 %v1544, 2147483648
      %v1643 = vsel %vm1641, %v1642, %v1640
      %v1644 = vrsqrt.pop %v1546
      %v1645 = vmul.f32 %v1546, %v1644
      %vm1646 = vcmp.eq.f32.partialorder %v1546, inf
      %v1647 = vsel %vm1646, %v1546, %v1645
      %vm1648 = vcmp.eq.f32.partialorder %v1546, 0.0
      %v1649 = vand.u32 %v1546, 2147483648
      %v1650 = vsel %vm1648, %v1649, %v1647
      %v1651 = vrsqrt.pop %v1548
      %v1652 = vmul.f32 %v1548, %v1651
      %vm1653 = vcmp.eq.f32.partialorder %v1548, inf
      %v1654 = vsel %vm1653, %v1548, %v1652
      %vm1655 = vcmp.eq.f32.partialorder %v1548, 0.0
      %v1656 = vand.u32 %v1548, 2147483648
      %v1657 = vsel %vm1655, %v1656, %v1654
      %v1658 = vrsqrt.pop %v1550
      %v1659 = vmul.f32 %v1550, %v1658
      %vm1660 = vcmp.eq.f32.partialorder %v1550, inf
      %v1661 = vsel %vm1660, %v1550, %v1659
      %vm1662 = vcmp.eq.f32.partialorder %v1550, 0.0
      %v1663 = vand.u32 %v1550, 2147483648
      %v1664 = vsel %vm1662, %v1663, %v1661
      %v1665 = vrsqrt.pop %v1552
      %v1666 = vmul.f32 %v1552, %v1665
      %vm1667 = vcmp.eq.f32.partialorder %v1552, inf
      %v1668 = vsel %vm1667, %v1552, %v1666
      %vm1669 = vcmp.eq.f32.partialorder %v1552, 0.0
      %v1670 = vand.u32 %v1552, 2147483648
      %v1671 = vsel %vm1669, %v1670, %v1668
      %v1672 = vrsqrt.pop %v1554
      %v1673 = vmul.f32 %v1554, %v1672
      %vm1674 = vcmp.eq.f32.partialorder %v1554, inf
      %v1675 = vsel %vm1674, %v1554, %v1673
      %vm1676 = vcmp.eq.f32.partialorder %v1554, 0.0
      %v1677 = vand.u32 %v1554, 2147483648
      %v1678 = vsel %vm1676, %v1677, %v1675
      %v1679 = vrsqrt.pop %v1556
      %v1680 = vmul.f32 %v1556, %v1679
      %vm1681 = vcmp.eq.f32.partialorder %v1556, inf
      %v1682 = vsel %vm1681, %v1556, %v1680
      %vm1683 = vcmp.eq.f32.partialorder %v1556, 0.0
      %v1684 = vand.u32 %v1556, 2147483648
      %v1685 = vsel %vm1683, %v1684, %v1682
      %v1686 = vrsqrt.pop %v1558
      %v1687 = vmul.f32 %v1558, %v1686
      %vm1688 = vcmp.eq.f32.partialorder %v1558, inf
      %v1689 = vsel %vm1688, %v1558, %v1687
      %vm1690 = vcmp.eq.f32.partialorder %v1558, 0.0
      %v1691 = vand.u32 %v1558, 2147483648
      %v1692 = vsel %vm1690, %v1691, %v1689
      %v1693 = vrsqrt.pop %v1560
      %v1694 = vmul.f32 %v1560, %v1693
      %vm1695 = vcmp.eq.f32.partialorder %v1560, inf
      %v1696 = vsel %vm1695, %v1560, %v1694
      %vm1697 = vcmp.eq.f32.partialorder %v1560, 0.0
      %v1698 = vand.u32 %v1560, 2147483648
      %v1699 = vsel %vm1697, %v1698, %v1696
      %v1700 = vrsqrt.pop %v1562
      %v1701 = vmul.f32 %v1562, %v1700
      %vm1702 = vcmp.eq.f32.partialorder %v1562, inf
      %v1703 = vsel %vm1702, %v1562, %v1701
      %vm1704 = vcmp.eq.f32.partialorder %v1562, 0.0
      %v1705 = vand.u32 %v1562, 2147483648
      %v1706 = vsel %vm1704, %v1705, %v1703
      %v1707 = vrsqrt.pop %v1564
      %v1708 = vmul.f32 %v1564, %v1707
      %vm1709 = vcmp.eq.f32.partialorder %v1564, inf
      %v1710 = vsel %vm1709, %v1564, %v1708
      %vm1711 = vcmp.eq.f32.partialorder %v1564, 0.0
      %v1712 = vand.u32 %v1564, 2147483648
      %v1713 = vsel %vm1711, %v1712, %v1710
      %v1714 = vrsqrt.pop %v1566
      %v1715 = vmul.f32 %v1566, %v1714
      %vm1716 = vcmp.eq.f32.partialorder %v1566, inf
      %v1717 = vsel %vm1716, %v1566, %v1715
      %vm1718 = vcmp.eq.f32.partialorder %v1566, 0.0
      %v1719 = vand.u32 %v1566, 2147483648
      %v1720 = vsel %vm1718, %v1719, %v1717
      %v1721 = vrsqrt.pop %v1568
      %v1722 = vmul.f32 %v1568, %v1721
      %vm1723 = vcmp.eq.f32.partialorder %v1568, inf
      %v1724 = vsel %vm1723, %v1568, %v1722
      %vm1725 = vcmp.eq.f32.partialorder %v1568, 0.0
      %v1726 = vand.u32 %v1568, 2147483648
      %v1727 = vsel %vm1725, %v1726, %v1724
      %v1728 = vrsqrt.pop %v1570
      %v1729 = vmul.f32 %v1570, %v1728
      %vm1730 = vcmp.eq.f32.partialorder %v1570, inf
      %v1731 = vsel %vm1730, %v1570, %v1729
      %vm1732 = vcmp.eq.f32.partialorder %v1570, 0.0
      %v1733 = vand.u32 %v1570, 2147483648
      %v1734 = vsel %vm1732, %v1733, %v1731
      %v1735 = vrsqrt.pop %v1572
      %v1736 = vmul.f32 %v1572, %v1735
      %vm1737 = vcmp.eq.f32.partialorder %v1572, inf
      %v1738 = vsel %vm1737, %v1572, %v1736
      %vm1739 = vcmp.eq.f32.partialorder %v1572, 0.0
      %v1740 = vand.u32 %v1572, 2147483648
      %v1741 = vsel %vm1739, %v1740, %v1738
      %v1742 = vrsqrt.pop %v1574
      %v1743 = vmul.f32 %v1574, %v1742
      %vm1744 = vcmp.eq.f32.partialorder %v1574, inf
      %v1745 = vsel %vm1744, %v1574, %v1743
      %vm1746 = vcmp.eq.f32.partialorder %v1574, 0.0
      %v1747 = vand.u32 %v1574, 2147483648
      %v1748 = vsel %vm1746, %v1747, %v1745
      %v1749 = vrsqrt.pop %v1576
      %v1750 = vmul.f32 %v1576, %v1749
      %vm1751 = vcmp.eq.f32.partialorder %v1576, inf
      %v1752 = vsel %vm1751, %v1576, %v1750
      %vm1753 = vcmp.eq.f32.partialorder %v1576, 0.0
      %v1754 = vand.u32 %v1576, 2147483648
      %v1755 = vsel %vm1753, %v1754, %v1752
      %v1756 = vrsqrt.pop %v1578
      %v1757 = vmul.f32 %v1578, %v1756
      %vm1758 = vcmp.eq.f32.partialorder %v1578, inf
      %v1759 = vsel %vm1758, %v1578, %v1757
      %vm1760 = vcmp.eq.f32.partialorder %v1578, 0.0
      %v1761 = vand.u32 %v1578, 2147483648
      %v1762 = vsel %vm1760, %v1761, %v1759
      %v1763 = vrsqrt.pop %v1580
      %v1764 = vmul.f32 %v1580, %v1763
      %vm1765 = vcmp.eq.f32.partialorder %v1580, inf
      %v1766 = vsel %vm1765, %v1580, %v1764
      %vm1767 = vcmp.eq.f32.partialorder %v1580, 0.0
      %v1768 = vand.u32 %v1580, 2147483648
      %v1769 = vsel %vm1767, %v1768, %v1766
      %v1770 = vrsqrt.pop %v1582
      %v1771 = vmul.f32 %v1582, %v1770
      %vm1772 = vcmp.eq.f32.partialorder %v1582, inf
      %v1773 = vsel %vm1772, %v1582, %v1771
      %vm1774 = vcmp.eq.f32.partialorder %v1582, 0.0
      %v1775 = vand.u32 %v1582, 2147483648
      %v1776 = vsel %vm1774, %v1775, %v1773
      %v1777 = vrsqrt.pop %v1584
      %v1778 = vmul.f32 %v1584, %v1777
      %vm1779 = vcmp.eq.f32.partialorder %v1584, inf
      %v1780 = vsel %vm1779, %v1584, %v1778
      %vm1781 = vcmp.eq.f32.partialorder %v1584, 0.0
      %v1782 = vand.u32 %v1584, 2147483648
      %v1783 = vsel %vm1781, %v1782, %v1780
      %v1784 = vrsqrt.pop %v1586
      %v1785 = vmul.f32 %v1586, %v1784
      %vm1786 = vcmp.eq.f32.partialorder %v1586, inf
      %v1787 = vsel %vm1786, %v1586, %v1785
      %vm1788 = vcmp.eq.f32.partialorder %v1586, 0.0
      %v1789 = vand.u32 %v1586, 2147483648
      %v1790 = vsel %vm1788, %v1789, %v1787
      %v1791 = vrsqrt.pop %v1588
      %v1792 = vmul.f32 %v1588, %v1791
      %vm1793 = vcmp.eq.f32.partialorder %v1588, inf
      %v1794 = vsel %vm1793, %v1588, %v1792
      %vm1795 = vcmp.eq.f32.partialorder %v1588, 0.0
      %v1796 = vand.u32 %v1588, 2147483648
      %v1797 = vsel %vm1795, %v1796, %v1794
      %v1798 = vrsqrt.pop %v1590
      %v1799 = vmul.f32 %v1590, %v1798
      %vm1800 = vcmp.eq.f32.partialorder %v1590, inf
      %v1801 = vsel %vm1800, %v1590, %v1799
      %vm1802 = vcmp.eq.f32.partialorder %v1590, 0.0
      %v1803 = vand.u32 %v1590, 2147483648
      %v1804 = vsel %vm1802, %v1803, %v1801
      %v1805 = vrsqrt.pop %v1592
      %v1806 = vmul.f32 %v1592, %v1805
      %vm1807 = vcmp.eq.f32.partialorder %v1592, inf
      %v1808 = vsel %vm1807, %v1592, %v1806
      %vm1809 = vcmp.eq.f32.partialorder %v1592, 0.0
      %v1810 = vand.u32 %v1592, 2147483648
      %v1811 = vsel %vm1809, %v1810, %v1808
      %v1812 = vrsqrt.pop %v1594
      %v1813 = vmul.f32 %v1594, %v1812
      %vm1814 = vcmp.eq.f32.partialorder %v1594, inf
      %v1815 = vsel %vm1814, %v1594, %v1813
      %vm1816 = vcmp.eq.f32.partialorder %v1594, 0.0
      %v1817 = vand.u32 %v1594, 2147483648
      %v1818 = vsel %vm1816, %v1817, %v1815
      %v1819 = vmax.f32 %v1601, 1e-12
      %v1820 = vmax.f32 %v1608, 1e-12
      %v1821 = vmax.f32 %v1615, 1e-12
      %v1822 = vmax.f32 %v1622, 1e-12
      %v1823 = vmax.f32 %v1629, 1e-12
      %v1824 = vmax.f32 %v1636, 1e-12
      %v1825 = vmax.f32 %v1643, 1e-12
      %v1826 = vmax.f32 %v1650, 1e-12
      %v1827 = vmax.f32 %v1657, 1e-12
      %v1828 = vmax.f32 %v1664, 1e-12
      %v1829 = vmax.f32 %v1671, 1e-12
      %v1830 = vmax.f32 %v1678, 1e-12
      %v1831 = vmax.f32 %v1685, 1e-12
      %v1832 = vmax.f32 %v1692, 1e-12
      %v1833 = vmax.f32 %v1699, 1e-12
      %v1834 = vmax.f32 %v1706, 1e-12
      %v1835 = vmax.f32 %v1713, 1e-12
      %v1836 = vmax.f32 %v1720, 1e-12
      %v1837 = vmax.f32 %v1727, 1e-12
      %v1838 = vmax.f32 %v1734, 1e-12
      %v1839 = vmax.f32 %v1741, 1e-12
      %v1840 = vmax.f32 %v1748, 1e-12
      %v1841 = vmax.f32 %v1755, 1e-12
      %v1842 = vmax.f32 %v1762, 1e-12
      %v1843 = vmax.f32 %v1769, 1e-12
      %v1844 = vmax.f32 %v1776, 1e-12
      %v1845 = vmax.f32 %v1783, 1e-12
      %v1846 = vmax.f32 %v1790, 1e-12
      %v1847 = vmax.f32 %v1797, 1e-12
      %v1848 = vmax.f32 %v1804, 1e-12
      %v1849 = vmax.f32 %v1811, 1e-12
      %v1850 = vmax.f32 %v1818, 1e-12
      %v1851 = vrcp.pop %v1819
      %v1852 = vmul.f32 %v1467, %v1851
      %v1853 = vrcp.pop %v1820
      %v1854 = vmul.f32 %v1468, %v1853
      %v1855 = vrcp.pop %v1821
      %v1856 = vmul.f32 %v1469, %v1855
      %v1857 = vrcp.pop %v1822
      %v1858 = vmul.f32 %v1470, %v1857
      %v1859 = vrcp.pop %v1823
      %v1860 = vmul.f32 %v1471, %v1859
      %v1861 = vrcp.pop %v1824
      %v1862 = vmul.f32 %v1472, %v1861
      %v1863 = vrcp.pop %v1825
      %v1864 = vmul.f32 %v1473, %v1863
      %v1865 = vrcp.pop %v1826
      %v1866 = vmul.f32 %v1474, %v1865
      %v1867 = vrcp.pop %v1827
      %v1868 = vmul.f32 %v1475, %v1867
      %v1869 = vrcp.pop %v1828
      %v1870 = vmul.f32 %v1476, %v1869
      %v1871 = vrcp.pop %v1829
      %v1872 = vmul.f32 %v1477, %v1871
      %v1873 = vrcp.pop %v1830
      %v1874 = vmul.f32 %v1478, %v1873
      %v1875 = vrcp.pop %v1831
      %v1876 = vmul.f32 %v1479, %v1875
      %v1877 = vrcp.pop %v1832
      %v1878 = vmul.f32 %v1480, %v1877
      %v1879 = vrcp.pop %v1833
      %v1880 = vmul.f32 %v1481, %v1879
      %v1881 = vrcp.pop %v1834
      %v1882 = vmul.f32 %v1482, %v1881
      %v1883 = vrcp.pop %v1835
      %v1884 = vmul.f32 %v1483, %v1883
      %v1885 = vrcp.pop %v1836
      %v1886 = vmul.f32 %v1484, %v1885
      %v1887 = vrcp.pop %v1837
      %v1888 = vmul.f32 %v1485, %v1887
      %v1889 = vrcp.pop %v1838
      %v1890 = vmul.f32 %v1486, %v1889
      %v1891 = vrcp.pop %v1839
      %v1892 = vmul.f32 %v1487, %v1891
      %v1893 = vrcp.pop %v1840
      %v1894 = vmul.f32 %v1488, %v1893
      %v1895 = vrcp.pop %v1841
      %v1896 = vmul.f32 %v1489, %v1895
      %v1897 = vrcp.pop %v1842
      %v1898 = vmul.f32 %v1490, %v1897
      %v1899 = vrcp.pop %v1843
      %v1900 = vmul.f32 %v1491, %v1899
      %v1901 = vrcp.pop %v1844
      %v1902 = vmul.f32 %v1492, %v1901
      %v1903 = vrcp.pop %v1845
      %v1904 = vmul.f32 %v1493, %v1903
      %v1905 = vrcp.pop %v1846
      %v1906 = vmul.f32 %v1494, %v1905
      %v1907 = vrcp.pop %v1847
      %v1908 = vmul.f32 %v1495, %v1907
      %v1909 = vrcp.pop %v1848
      %v1910 = vmul.f32 %v1496, %v1909
      %v1911 = vrcp.pop %v1849
      %v1912 = vmul.f32 %v1497, %v1911
      %v1913 = vrcp.pop %v1850
      %v1914 = vmul.f32 %v1498, %v1913
      %s1915 = sld [smem:[#allocation3]]
      %v1916 = vstv %s1915
      %v1917 = vmul.f32 %v1916, %v1404
      %v1918 = vmul.f32 %v1916, %v1406
      %v1919 = vmul.f32 %v1916, %v1408
      %v1920 = vmul.f32 %v1916, %v1410
      %v1921 = vmul.f32 %v1916, %v1412
      %v1922 = vmul.f32 %v1916, %v1414
      %v1923 = vmul.f32 %v1916, %v1416
      %v1924 = vmul.f32 %v1916, %v1418
      %v1925 = vmul.f32 %v1916, %v1420
      %v1926 = vmul.f32 %v1916, %v1422
      %v1927 = vmul.f32 %v1916, %v1424
      %v1928 = vmul.f32 %v1916, %v1426
      %v1929 = vmul.f32 %v1916, %v1428
      %v1930 = vmul.f32 %v1916, %v1430
      %v1931 = vmul.f32 %v1916, %v1432
      %v1932 = vmul.f32 %v1916, %v1434
      %v1933 = vmul.f32 %v1916, %v1436
      %v1934 = vmul.f32 %v1916, %v1438
      %v1935 = vmul.f32 %v1916, %v1440
      %v1936 = vmul.f32 %v1916, %v1442
      %v1937 = vmul.f32 %v1916, %v1444
      %v1938 = vmul.f32 %v1916, %v1446
      %v1939 = vmul.f32 %v1916, %v1448
      %v1940 = vmul.f32 %v1916, %v1450
      %v1941 = vmul.f32 %v1916, %v1452
      %v1942 = vmul.f32 %v1916, %v1454
      %v1943 = vmul.f32 %v1916, %v1456
      %v1944 = vmul.f32 %v1916, %v1458
      %v1945 = vmul.f32 %v1916, %v1460
      %v1946 = vmul.f32 %v1916, %v1462
      %v1947 = vmul.f32 %v1916, %v1464
      %v1948 = vmul.f32 %v1916, %v1466
      %s1949 = sld [smem:[#allocation3 + $0x1]]
      %v1950 = vstv %s1949
      %v1951 = vmul.f32 %v1950, %v1852
      %v1952 = vmul.f32 %v1950, %v1854
      %v1953 = vmul.f32 %v1950, %v1856
      %v1954 = vmul.f32 %v1950, %v1858
      %v1955 = vmul.f32 %v1950, %v1860
      %v1956 = vmul.f32 %v1950, %v1862
      %v1957 = vmul.f32 %v1950, %v1864
      %v1958 = vmul.f32 %v1950, %v1866
      %v1959 = vmul.f32 %v1950, %v1868
      %v1960 = vmul.f32 %v1950, %v1870
      %v1961 = vmul.f32 %v1950, %v1872
      %v1962 = vmul.f32 %v1950, %v1874
      %v1963 = vmul.f32 %v1950, %v1876
      %v1964 = vmul.f32 %v1950, %v1878
      %v1965 = vmul.f32 %v1950, %v1880
      %v1966 = vmul.f32 %v1950, %v1882
      %v1967 = vmul.f32 %v1950, %v1884
      %v1968 = vmul.f32 %v1950, %v1886
      %v1969 = vmul.f32 %v1950, %v1888
      %v1970 = vmul.f32 %v1950, %v1890
      %v1971 = vmul.f32 %v1950, %v1892
      %v1972 = vmul.f32 %v1950, %v1894
      %v1973 = vmul.f32 %v1950, %v1896
      %v1974 = vmul.f32 %v1950, %v1898
      %v1975 = vmul.f32 %v1950, %v1900
      %v1976 = vmul.f32 %v1950, %v1902
      %v1977 = vmul.f32 %v1950, %v1904
      %v1978 = vmul.f32 %v1950, %v1906
      %v1979 = vmul.f32 %v1950, %v1908
      %v1980 = vmul.f32 %v1950, %v1910
      %v1981 = vmul.f32 %v1950, %v1912
      %v1982 = vmul.f32 %v1950, %v1914
      %v1983 = vadd.f32 %v1917, %v1951
      %v1984 = vadd.f32 %v1918, %v1952
      %v1985 = vadd.f32 %v1919, %v1953
      %v1986 = vadd.f32 %v1920, %v1954
      %v1987 = vadd.f32 %v1921, %v1955
      %v1988 = vadd.f32 %v1922, %v1956
      %v1989 = vadd.f32 %v1923, %v1957
      %v1990 = vadd.f32 %v1924, %v1958
      %v1991 = vadd.f32 %v1925, %v1959
      %v1992 = vadd.f32 %v1926, %v1960
      %v1993 = vadd.f32 %v1927, %v1961
      %v1994 = vadd.f32 %v1928, %v1962
      %v1995 = vadd.f32 %v1929, %v1963
      %v1996 = vadd.f32 %v1930, %v1964
      %v1997 = vadd.f32 %v1931, %v1965
      %v1998 = vadd.f32 %v1932, %v1966
      %v1999 = vadd.f32 %v1933, %v1967
      %v2000 = vadd.f32 %v1934, %v1968
      %v2001 = vadd.f32 %v1935, %v1969
      %v2002 = vadd.f32 %v1936, %v1970
      %v2003 = vadd.f32 %v1937, %v1971
      %v2004 = vadd.f32 %v1938, %v1972
      %v2005 = vadd.f32 %v1939, %v1973
      %v2006 = vadd.f32 %v1940, %v1974
      %v2007 = vadd.f32 %v1941, %v1975
      %v2008 = vadd.f32 %v1942, %v1976
      %v2009 = vadd.f32 %v1943, %v1977
      %v2010 = vadd.f32 %v1944, %v1978
      %v2011 = vadd.f32 %v1945, %v1979
      %v2012 = vadd.f32 %v1946, %v1980
      %v2013 = vadd.f32 %v1947, %v1981
      %v2014 = vadd.f32 %v1948, %v1982
      %v2015 = vpack.c.bf16 %v1984, %v1983
      %v2016 = vpack.c.bf16 %v1986, %v1985
      %v2017 = vpack.c.bf16 %v1988, %v1987
      %v2018 = vpack.c.bf16 %v1990, %v1989
      %v2019 = vpack.c.bf16 %v1992, %v1991
      %v2020 = vpack.c.bf16 %v1994, %v1993
      %v2021 = vpack.c.bf16 %v1996, %v1995
      %v2022 = vpack.c.bf16 %v1998, %v1997
      %v2023 = vpack.c.bf16 %v2000, %v1999
      %v2024 = vpack.c.bf16 %v2002, %v2001
      %v2025 = vpack.c.bf16 %v2004, %v2003
      %v2026 = vpack.c.bf16 %v2006, %v2005
      %v2027 = vpack.c.bf16 %v2008, %v2007
      %v2028 = vpack.c.bf16 %v2010, %v2009
      %v2029 = vpack.c.bf16 %v2012, %v2011
      %v2030 = vpack.c.bf16 %v2014, %v2013
      %v2047 = vunpack.c.l.b16 %v2015
      %v2048 = vunpack.c.h.b16 %v2015
      %v2049 = vunpack.c.l.b16 %v2016
      %v2050 = vunpack.c.h.b16 %v2016
      %v2051 = vunpack.c.l.b16 %v2017
      %v2052 = vunpack.c.h.b16 %v2017
      %v2053 = vunpack.c.l.b16 %v2018
      %v2054 = vunpack.c.h.b16 %v2018
      %v2055 = vunpack.c.l.b16 %v2019
      %v2056 = vunpack.c.h.b16 %v2019
      %v2057 = vunpack.c.l.b16 %v2020
      %v2058 = vunpack.c.h.b16 %v2020
      %v2059 = vunpack.c.l.b16 %v2021
      %v2060 = vunpack.c.h.b16 %v2021
      %v2061 = vunpack.c.l.b16 %v2022
      %v2062 = vunpack.c.h.b16 %v2022
      %v2063 = vunpack.c.l.b16 %v2023
      %v2064 = vunpack.c.h.b16 %v2023
      %v2065 = vunpack.c.l.b16 %v2024
      %v2066 = vunpack.c.h.b16 %v2024
      %v2067 = vunpack.c.l.b16 %v2025
      %v2068 = vunpack.c.h.b16 %v2025
      %v2069 = vunpack.c.l.b16 %v2026
      %v2070 = vunpack.c.h.b16 %v2026
      %v2071 = vunpack.c.l.b16 %v2027
      %v2072 = vunpack.c.h.b16 %v2027
      %v2073 = vunpack.c.l.b16 %v2028
      %v2074 = vunpack.c.h.b16 %v2028
      %v2075 = vunpack.c.l.b16 %v2029
      %v2076 = vunpack.c.h.b16 %v2029
      %v2077 = vunpack.c.l.b16 %v2030
      %v2078 = vunpack.c.h.b16 %v2030
      %v2079 = vpack.c.b16 %v2047, %v2047
      %v2080 = vpack.c.b16 %v2048, %v2048
      %v2081 = vpack.c.b16 %v2049, %v2049
      %v2082 = vpack.c.b16 %v2050, %v2050
      %v2083 = vpack.c.b16 %v2051, %v2051
      %v2084 = vpack.c.b16 %v2052, %v2052
      %v2085 = vpack.c.b16 %v2053, %v2053
      %v2086 = vpack.c.b16 %v2054, %v2054
      %v2087 = vpack.c.b16 %v2055, %v2055
      %v2088 = vpack.c.b16 %v2056, %v2056
      %v2089 = vpack.c.b16 %v2057, %v2057
      %v2090 = vpack.c.b16 %v2058, %v2058
      %v2091 = vpack.c.b16 %v2059, %v2059
      %v2092 = vpack.c.b16 %v2060, %v2060
      %v2093 = vpack.c.b16 %v2061, %v2061
      %v2094 = vpack.c.b16 %v2062, %v2062
      %v2095 = vpack.c.b16 %v2063, %v2063
      %v2096 = vpack.c.b16 %v2064, %v2064
      %v2097 = vpack.c.b16 %v2065, %v2065
      %v2098 = vpack.c.b16 %v2066, %v2066
      %v2099 = vpack.c.b16 %v2067, %v2067
      %v2100 = vpack.c.b16 %v2068, %v2068
      %v2101 = vpack.c.b16 %v2069, %v2069
      %v2102 = vpack.c.b16 %v2070, %v2070
      %v2103 = vpack.c.b16 %v2071, %v2071
      %v2104 = vpack.c.b16 %v2072, %v2072
      %v2105 = vpack.c.b16 %v2073, %v2073
      %v2106 = vpack.c.b16 %v2074, %v2074
      %v2107 = vpack.c.b16 %v2075, %v2075
      %v2108 = vpack.c.b16 %v2076, %v2076
      %v2109 = vpack.c.b16 %v2077, %v2077
      %v2110 = vpack.c.b16 %v2078, %v2078
      %2143 = vst [vmem:[#allocation13] sm:$0xf] %v2079
      %2144 = vst [vmem:[#allocation13 + $0x4] sm:$0xf] %v2080
      %2145 = vst [vmem:[#allocation13 + $0x8] sm:$0xf] %v2081
      %2146 = vst [vmem:[#allocation13 + $0xc] sm:$0xf] %v2082
      %2147 = vst [vmem:[#allocation13 + $0x10] sm:$0xf] %v2083
      %2148 = vst [vmem:[#allocation13 + $0x14] sm:$0xf] %v2084
      %2149 = vst [vmem:[#allocation13 + $0x18] sm:$0xf] %v2085
      %2150 = vst [vmem:[#allocation13 + $0x1c] sm:$0xf] %v2086
      %2151 = vst [vmem:[#allocation13 + $0x20] sm:$0xf] %v2087
      %2152 = vst [vmem:[#allocation13 + $0x24] sm:$0xf] %v2088
      %2153 = vst [vmem:[#allocation13 + $0x28] sm:$0xf] %v2089
      %2154 = vst [vmem:[#allocation13 + $0x2c] sm:$0xf] %v2090
      %2155 = vst [vmem:[#allocation13 + $0x30] sm:$0xf] %v2091
      %2156 = vst [vmem:[#allocation13 + $0x34] sm:$0xf] %v2092
      %2157 = vst [vmem:[#allocation13 + $0x38] sm:$0xf] %v2093
      %2158 = vst [vmem:[#allocation13 + $0x3c] sm:$0xf] %v2094
      %2159 = vst [vmem:[#allocation13 + $0x40] sm:$0xf] %v2095
      %2160 = vst [vmem:[#allocation13 + $0x44] sm:$0xf] %v2096
      %2161 = vst [vmem:[#allocation13 + $0x48] sm:$0xf] %v2097
      %2162 = vst [vmem:[#allocation13 + $0x4c] sm:$0xf] %v2098
      %2163 = vst [vmem:[#allocation13 + $0x50] sm:$0xf] %v2099
      %2164 = vst [vmem:[#allocation13 + $0x54] sm:$0xf] %v2100
      %2165 = vst [vmem:[#allocation13 + $0x58] sm:$0xf] %v2101
      %2166 = vst [vmem:[#allocation13 + $0x5c] sm:$0xf] %v2102
      %2167 = vst [vmem:[#allocation13 + $0x60] sm:$0xf] %v2103
      %2168 = vst [vmem:[#allocation13 + $0x64] sm:$0xf] %v2104
      %2169 = vst [vmem:[#allocation13 + $0x68] sm:$0xf] %v2105
      %2170 = vst [vmem:[#allocation13 + $0x6c] sm:$0xf] %v2106
      %2171 = vst [vmem:[#allocation13 + $0x70] sm:$0xf] %v2107
      %2172 = vst [vmem:[#allocation13 + $0x74] sm:$0xf] %v2108
      %2173 = vst [vmem:[#allocation13 + $0x78] sm:$0xf] %v2109
      %2174 = vst [vmem:[#allocation13 + $0x7c] sm:$0xf] %v2110
    $region53: #{tpu_custom_call.1} parent=1 // pred_fallthru
      _
    // Predicated region
    $region54: #{tpu_custom_call.1} parent=1 // pred_check
      _
    $region55: #{tpu_custom_call.1} parent=1 // pred_check_branch
      %2176 = sbr.rel (0) target = $region57
    $region56: #{tpu_custom_call.1} parent=1 // pred_region
      %s2178 = ssub.s32 2048, 2048
      %2179 = vsyncadd [#allocation5], %s2178
      %s2180 = sshll.u32 [#allocation13], 4
      %s2181 = int_to_ptr.vmem [resolvable:$true] %s2180
      %2186 = dma.vmem_to_hbm [thread:$0]  %s2181, 2048, %s6, [#allocation5], 64, 64, 4
    $region57: #{tpu_custom_call.1} parent=1 // pred_fallthru
      _
    // Predicated region
    $region58: #{tpu_custom_call.1} parent=1 // pred_check
      _
    $region59: #{tpu_custom_call.1} parent=1 // pred_check_branch
      %2188 = sbr.rel (0) target = $region61
    $region60: #{tpu_custom_call.1} parent=1 // pred_region
      %2189 = dma.done [#allocation5], 2048
    $region61: #{tpu_custom_call.1} parent=1 // pred_fallthru
      _
    %2190 = vsyncpa [#allocation4], 1
    %2191 = vsyncpa [#allocation9], 1
    %2192 = vsyncpa [#allocation12], 1
    %2193 = vsyncpa [#allocation5], 1
    %2194 = vsyncpa [#allocation6], 1

</llo_original>
